<compile_context>
chip_gen: v6e
topology: v6e:2x2x1
jax: 0.10.0
libtpu: 0.0.40
codegen_flags: <defaults>
</compile_context>

<pallas_src>
from functools import partial

import jax
import jax.numpy as jnp
import numpy as np
from jax.experimental import pallas as pl
from jax.experimental.pallas import tpu as pltpu


def _gist_loss_kernel(a_mb_ref, p_mb_ref, ga_mb_ref, gp_mb_ref,
                      p_cand_ref, a_cand_ref, gp_cand_ref, ga_cand_ref,
                      out_ref,
                      a_sc, p_sc, m_sc, l_sc, thr_sc, tgt_sc, row_sc, *,
                      rb, bt, temp, margin, strategy,
                      contrast_anchors, contrast_positives):
    """Grid: (row-block i, candidate tile k).  Streaming log-sum-exp over the candidate axis."""
    i = pl.program_id(0)
    k = pl.program_id(1)
    inv_t = jnp.float32(1.0 / temp)
    neg_inf = jnp.float32(-jnp.inf)

    @pl.when(k == 0)
    def _init():
        # Hoisted per-row-block work (once per row block, not once per candidate tile):
        #   * 1/temperature folded into the (rb, Dp) operands
        #   * false-negative threshold from the guide row-wise dot
        #   * target (positive) logit
        #   * global row index (replaces a per-tile row iota)
        a_mb = a_mb_ref[...]
        p_mb = p_mb_ref[...]
        a_sc[...] = a_mb * inv_t
        p_sc[...] = p_mb * inv_t
        # Finite floor (scores are bounded by 1/temp) keeps exp() NaN-free even if a whole
        # candidate tile is masked to -inf for some row.
        m_sc[...] = jnp.full((rb, 1), -1e30, jnp.float32)
        l_sc[...] = jnp.zeros((rb, 1), jnp.float32)
        ga = ga_mb_ref[...].astype(jnp.float32)
        gp = gp_mb_ref[...].astype(jnp.float32)
        guided = jnp.sum(ga * gp, axis=-1, keepdims=True)      # guide-cos(anchor_r, positive_r)
        if strategy == "absolute":
            thr_sc[...] = guided - jnp.float32(margin)
        else:  # "relative"
            thr_sc[...] = guided * jnp.float32(1.0 - margin)
        # target logit = cos(anchor_r, positive_r) / temperature (never masked: pos_mask)
        tgt_sc[...] = jnp.sum(a_sc[...] * p_mb, axis=-1, keepdims=True)
        row_sc[...] = i * rb + jax.lax.broadcasted_iota(jnp.int32, (rb, 1), 0)

    thresh = thr_sc[...]          # (rb, 1)
    a_s = a_sc[...]               # (rb, Dp)  pre-scaled by 1/temperature
    p_s = p_sc[...]
    ga_mb = ga_mb_ref[...]        # (rb, Dgp) guide rows (possibly bf16)
    gp_mb = gp_mb_ref[...]

    def simT(x, y):               # x @ y.T on the MXU, f32 accumulation
        return jax.lax.dot_general(x, y, (((1,), (1,)), ((), ())),
                                   preferred_element_type=jnp.float32)

    # positive location for this row block within this candidate tile
    col = jax.lax.broadcasted_iota(jnp.int32, (rb, bt), 1)
    pos_mask = col == (row_sc[...] - k * bt)

    # anchor-positive block (always present; its "diagonal" holds the CE target)
    s_ap = simT(a_s, p_cand_ref[...])                       # (rb, bt), already / temp
    g_ap = simT(ga_mb, gp_cand_ref[...])                    # guide cosines (f32 acc)
    s_ap = jnp.where((g_ap > thresh) & jnp.logical_not(pos_mask), neg_inf, s_ap)
    m_tile = jnp.max(s_ap, axis=-1, keepdims=True)
    blocks = [s_ap]

    if contrast_anchors:          # anchor-anchor block
        s_aa = simT(a_s, a_cand_ref[...])
        g_aa = simT(ga_mb, ga_cand_ref[...])
        s_aa = jnp.where(g_aa > thresh, neg_inf, s_aa)
        m_tile = jnp.maximum(m_tile, jnp.max(s_aa, axis=-1, keepdims=True))
        blocks.append(s_aa)

    if contrast_positives:        # positive-positive block
        s_pp = simT(p_s, p_cand_ref[...])
        g_pp = simT(gp_mb, gp_cand_ref[...])
        s_pp = jnp.where(g_pp > thresh, neg_inf, s_pp)
        m_tile = jnp.maximum(m_tile, jnp.max(s_pp, axis=-1, keepdims=True))
        blocks.append(s_pp)

    # online (streaming) log-sum-exp across candidate tiles
    m_prev = m_sc[...]
    m_new = jnp.maximum(m_prev, m_tile)
    l_new = jnp.exp(m_prev - m_new) * l_sc[...]
    for s in blocks:
        l_new = l_new + jnp.sum(jnp.exp(s - m_new), axis=-1, keepdims=True)
    l_sc[...] = l_new
    m_sc[...] = m_new

    @pl.when(k == pl.num_programs(1) - 1)
    def _finalize():
        lse = m_sc[...] + jnp.log(l_sc[...])   # (rb, 1)
        out_ref[...] = lse - tgt_sc[...]       # per-row cross entropy; wrapper does sum(.)/batch


def _round_up(x, m):
    return (x + m - 1) // m * m


def _l2_normalize(x, eps=1e-8):
    x = x.astype(jnp.float32)
    n = jnp.sqrt(jnp.sum(x * x, axis=-1, keepdims=True))
    return x / jnp.maximum(n, eps)


def _pad_lanes(x, dp):
    d = x.shape[-1]
    return x if d == dp else jnp.pad(x, ((0, 0), (0, dp - d)))


def _pick_block(total, target, mult):
    """Largest divisor of `total` that is <= target and a multiple of `mult` (fallback: total)."""
    best = None
    d = mult
    lim = min(total, target)
    while d <= lim:
        if total % d == 0:
            best = d
        d += mult
    return best if best is not None else total


@partial(jax.jit, static_argnames=("temperature", "margin", "margin_strategy",
                                   "mini_batch_size", "contrast_anchors", "contrast_positives",
                                   "row_block", "candidate_tile", "guide_in_bf16"))
def cached_gist_embed_loss(anchor_reps, positive_reps,
                           guide_anchor_reps, guide_positive_reps, *,
                           temperature=0.01, margin=0.0, margin_strategy="absolute",
                           mini_batch_size=32, contrast_anchors=True, contrast_positives=True,
                           row_block=None, candidate_tile=None, guide_in_bf16=True):
    # The torch module's mini_batch_size only controls gradient-cache chunking; the forward value
    # equals sum(per-row CE) / batch for any chunking, so the kernel row block is sized for the MXU.
    del mini_batch_size

    B, D = anchor_reps.shape
    Dg = guide_anchor_reps.shape[1]
    assert positive_reps.shape == (B, D)
    assert guide_positive_reps.shape == (B, Dg)
    if margin_strategy not in ("absolute", "relative"):
        raise ValueError("margin_strategy must be 'absolute' or 'relative'.")

    # Row block (MXU M dim) decoupled from mini_batch_size; candidate tile bounded so the
    # double-buffered candidate tiles stay within v7x's 64 MiB VMEM.
    sub = 16 if guide_in_bf16 else 8          # bf16 packs 16 rows per sublane tile
    rb = row_block if row_block is not None else _pick_block(B, 256, sub)
    bt = candidate_tile if candidate_tile is not None else _pick_block(B, 512, sub)
    assert B % rb == 0 and (rb % sub == 0 or rb == B), "row_block must divide B and be a multiple of 8/16"
    assert B % bt == 0 and (bt % sub == 0 or bt == B), "candidate_tile must divide B and be a multiple of 8/16"
    nrb, n_ct = B // rb, B // bt

    Dp = _round_up(D, 128)
    Dgp = _round_up(Dg, 128)
    gdt = jnp.bfloat16 if guide_in_bf16 else jnp.float32

    # L2 normalization hoisted out of the kernel (cosine == dot of unit vectors); feature dims are
    # zero-padded to a lane multiple (padding changes neither norms nor dots).  Guide embeddings feed
    # only the ">" masking comparison, so they are stored at reduced precision (bf16 by default).
    a_n = _pad_lanes(_l2_normalize(anchor_reps), Dp)
    p_n = _pad_lanes(_l2_normalize(positive_reps), Dp)
    ga_n = _pad_lanes(_l2_normalize(guide_anchor_reps), Dgp).astype(gdt)
    gp_n = _pad_lanes(_l2_normalize(guide_positive_reps), Dgp).astype(gdt)

    kernel = partial(_gist_loss_kernel, rb=rb, bt=bt, temp=temperature, margin=margin,
                     strategy=margin_strategy, contrast_anchors=contrast_anchors,
                     contrast_positives=contrast_positives)

    gbytes = 2 if guide_in_bf16 else 4
    # VMEM budget: double-buffered candidate tiles + resident row blocks + scratch -> explicit limit.
    cand_bytes = 2 * bt * (Dp * 4 + Dgp * gbytes)     # p/a candidates + gp/ga candidates (one buffer)
    mb_bytes = 2 * rb * (Dp * 4 + Dgp * gbytes)
    scratch_bytes = 2 * rb * Dp * 4 + 5 * rb * 128 * 4
    est = 2 * (cand_bytes + mb_bytes) + scratch_bytes + (1 << 20)
    vmem_limit = int(min(max(est * 3 // 2, 32 * 1024 * 1024), 100 * 1024 * 1024))

    n_blk = 1 + int(contrast_anchors) + int(contrast_positives)
    cost = pl.CostEstimate(
        flops=int(2 * B * B * n_blk * (Dp + Dgp)),
        transcendentals=int(n_blk * B * B + B),
        bytes_accessed=int((nrb + 1) * 2 * B * (Dp * 4 + Dgp * gbytes) + B * 4),
    )

    per_row_ce = pl.pallas_call(
        kernel,
        out_shape=jax.ShapeDtypeStruct((B, 1), jnp.float32),
        grid=(nrb, n_ct),
        in_specs=[
            pl.BlockSpec((rb, Dp), lambda i, k: (i, 0)),     # anchors, row block (resident over k)
            pl.BlockSpec((rb, Dp), lambda i, k: (i, 0)),     # positives, row block
            pl.BlockSpec((rb, Dgp), lambda i, k: (i, 0)),    # guide anchors, row block
            pl.BlockSpec((rb, Dgp), lambda i, k: (i, 0)),    # guide positives, row block
            pl.BlockSpec((bt, Dp), lambda i, k: (k, 0)),     # positive candidates tile (ap/pp RHS)
            pl.BlockSpec((bt, Dp), lambda i, k: (k, 0)),     # anchor candidates tile (aa RHS)
            pl.BlockSpec((bt, Dgp), lambda i, k: (k, 0)),    # guide positive candidates tile
            pl.BlockSpec((bt, Dgp), lambda i, k: (k, 0)),    # guide anchor candidates tile
        ],
        # per-row CE, written once per row block on the last candidate tile (resident across k)
        out_specs=pl.BlockSpec((rb, 1), lambda i, k: (i, 0)),
        scratch_shapes=[
            pltpu.VMEM((rb, Dp), jnp.float32),   # anchors  * (1/temperature)
            pltpu.VMEM((rb, Dp), jnp.float32),   # positives * (1/temperature)
            pltpu.VMEM((rb, 1), jnp.float32),    # running max       (online LSE)
            pltpu.VMEM((rb, 1), jnp.float32),    # running sum-exp   (online LSE)
            pltpu.VMEM((rb, 1), jnp.float32),    # false-negative threshold
            pltpu.VMEM((rb, 1), jnp.float32),    # target (positive) logit
            pltpu.VMEM((rb, 1), jnp.int32),      # global row index
        ],
        compiler_params=pltpu.CompilerParams(
            dimension_semantics=("parallel", "arbitrary"),
            vmem_limit_bytes=vmem_limit),
        cost_estimate=cost,
    )(a_n, p_n, ga_n, gp_n, p_n, a_n, gp_n, ga_n)

    # sum_mb( CrossEntropy(mean over mb) * mb / batch ) == sum(all per-row CE) / batch
    return jnp.sum(per_row_ce) / jnp.float32(B)


def reference_loss(anchors, positives, guide_anchors, guide_positives,
                   mini_batch_size, temperature, margin, strategy, guide_round_dtype=None):
    """Pure-JAX mirror of CachedGISTEmbedLoss.calculate_loss (forward value only).

    If guide_round_dtype is given, the normalized guide embeddings are rounded to that dtype before
    the guide similarity matmuls, mirroring the kernel's reduced-precision guide-masking path.
    """
    def l2n(x):
        x = x.astype(jnp.float32)
        n = jnp.linalg.norm(x, axis=-1, keepdims=True)
        return x / jnp.maximum(n, 1e-8)

    def simm(x, y):
        return jnp.matmul(x, y.T, precision="highest")

    an, pn = l2n(anchors), l2n(positives)
    gan, gpn = l2n(guide_anchors), l2n(guide_positives)
    if guide_round_dtype is not None:
        gan = gan.astype(guide_round_dtype).astype(jnp.float32)
        gpn = gpn.astype(guide_round_dtype).astype(jnp.float32)

    B = an.shape[0]
    total = jnp.float32(0.0)
    for begin in range(0, B, mini_batch_size):
        end = min(begin + mini_batch_size, B)
        mb = end - begin
        ap = simm(an[begin:end], pn)
        g_ap = simm(gan[begin:end], gpn)
        aa = simm(an[begin:end], an)
        g_aa = simm(gan[begin:end], gan)
        pp = simm(pn[begin:end], pn)
        g_pp = simm(gpn[begin:end], gpn)
        guided = jnp.diagonal(g_ap, offset=begin)[:, None]
        thresh = guided - margin if strategy == "absolute" else guided * (1.0 - margin)
        pos_mask = jnp.eye(mb, B, k=begin, dtype=bool)
        ap = jnp.where((g_ap > thresh) & ~pos_mask, -jnp.inf, ap)
        aa = jnp.where(g_aa > thresh, -jnp.inf, aa)
        pp = jnp.where(g_pp > thresh, -jnp.inf, pp)
        scores = jnp.concatenate([ap, aa, pp], axis=1) / temperature
        labels = jnp.arange(begin, end)
        logprobs = jax.nn.log_softmax(scores, axis=-1)
        ce = -logprobs[jnp.arange(mb), labels]
        total = total + jnp.mean(ce) * mb / B
    return total


if __name__ == "__main__":
    # small shapes consistent with the module: batch=32, semantic mini_batch=8, seq=8,
    # model dim=32, guide dim=64, vocab=100.
    B, L, V = 32, 8, 100
    D, Dg = 32, 64
    MB = 8

    key = jax.random.PRNGKey(0)
    k1, k2, k3, k4 = jax.random.split(key, 4)

    # deterministic synthetic "SentenceTransformer" parameters + (anchor, positive) token ids
    model_emb_table = jax.random.normal(k1, (V, D), jnp.float32) * 0.1
    guide_emb_table = jax.random.normal(k2, (V, Dg), jnp.float32) * 0.1
    anchor_ids = jax.random.randint(k3, (B, L), 0, V)
    positive_ids = jax.random.randint(k4, (B, L), 0, V)

    def encode(table, ids):  # mean-pooled "sentence_embedding"
        return jnp.mean(table[ids], axis=1)

    anchors = encode(model_emb_table, anchor_ids)            # (B, D)
    positives = encode(model_emb_table, positive_ids)        # (B, D)
    g_anchors = encode(guide_emb_table, anchor_ids)          # (B, Dg)
    g_positives = encode(guide_emb_table, positive_ids)      # (B, Dg)

    # Config 1: module defaults (absolute margin 0), bf16 guide masking, tiled row/candidate axes.
    loss1 = cached_gist_embed_loss(
        anchors, positives, g_anchors, g_positives,
        temperature=0.01, margin=0.0, margin_strategy="absolute",
        mini_batch_size=MB, row_block=16, candidate_tile=16, guide_in_bf16=True)
    loss1 = jax.block_until_ready(loss1)
    ref1 = reference_loss(anchors, positives, g_anchors, g_positives,
                          MB, 0.01, 0.0, "absolute", guide_round_dtype=jnp.bfloat16)
    np.testing.assert_allclose(np.asarray(loss1), np.asarray(ref1), rtol=2e-3, atol=2e-3)

    # Config 2: relative margin, f32 guide masking, full row block + 4 candidate tiles (online LSE).
    loss2 = cached_gist_embed_loss(
        anchors, positives, g_anchors, g_positives,
        temperature=0.01, margin=0.05, margin_strategy="relative",
        mini_batch_size=MB, row_block=32, candidate_tile=8, guide_in_bf16=False)
    loss2 = jax.block_until_ready(loss2)
    ref2 = reference_loss(anchors, positives, g_anchors, g_positives,
                          MB, 0.01, 0.05, "relative", guide_round_dtype=None)
    np.testing.assert_allclose(np.asarray(loss2), np.asarray(ref2), rtol=2e-3, atol=2e-3)

    print("KERNEL_OK")
</pallas_src>

<mosaic_0001>
module attributes {stable_mosaic.version = 11 : i64} {
  func.func @_gist_loss_kernel(%arg0: i32, %arg1: i32, %arg2: memref<16x128xf32, #tpu.memory_space<vmem>>, %arg3: memref<16x128xf32, #tpu.memory_space<vmem>>, %arg4: memref<16x128xbf16, #tpu.memory_space<vmem>>, %arg5: memref<16x128xbf16, #tpu.memory_space<vmem>>, %arg6: memref<16x128xf32, #tpu.memory_space<vmem>>, %arg7: memref<16x128xf32, #tpu.memory_space<vmem>>, %arg8: memref<16x128xbf16, #tpu.memory_space<vmem>>, %arg9: memref<16x128xbf16, #tpu.memory_space<vmem>>, %arg10: memref<16x1xf32, #tpu.memory_space<vmem>>, %arg11: memref<16x128xf32, #tpu.memory_space<vmem>>, %arg12: memref<16x128xf32, #tpu.memory_space<vmem>>, %arg13: memref<16x1xf32, #tpu.memory_space<vmem>>, %arg14: memref<16x1xf32, #tpu.memory_space<vmem>>, %arg15: memref<16x1xf32, #tpu.memory_space<vmem>>, %arg16: memref<16x1xf32, #tpu.memory_space<vmem>>, %arg17: memref<16x1xi32, #tpu.memory_space<vmem>>) attributes {dimension_semantics = [#tpu.dimension_semantics<parallel>, #tpu.dimension_semantics<arbitrary>], iteration_bounds = array<i64: 2, 2>, scalar_prefetch = 0 : i64, scratch_operands = 7 : i64, tpu.core_type = #tpu.core_type<tc>, window_params = [{transform_indices = @transform_0, window_bounds = array<i64: 16, 128>}, {transform_indices = @transform_1, window_bounds = array<i64: 16, 128>}, {transform_indices = @transform_2, window_bounds = array<i64: 16, 128>}, {transform_indices = @transform_3, window_bounds = array<i64: 16, 128>}, {transform_indices = @transform_4, window_bounds = array<i64: 16, 128>}, {transform_indices = @transform_5, window_bounds = array<i64: 16, 128>}, {transform_indices = @transform_6, window_bounds = array<i64: 16, 128>}, {transform_indices = @transform_7, window_bounds = array<i64: 16, 128>}, {transform_indices = @transform_8, window_bounds = array<i64: 16, 1>}]} {
    %c0_i32 = arith.constant 0 : i32
    %0 = arith.cmpi eq, %arg1, %c0_i32 : i32
    %1 = arith.extui %0 : i1 to i32
    %cst = arith.constant 1.000000e+02 : f32
    %c0_i32_0 = arith.constant 0 : i32
    %2 = arith.cmpi ne, %1, %c0_i32_0 : i32
    scf.if %2 {
      %c0_49 = arith.constant 0 : index
      %c0_50 = arith.constant 0 : index
      %78 = vector.load %arg2[%c0_49, %c0_50] : memref<16x128xf32, #tpu.memory_space<vmem>>, vector<16x128xf32>
      %c0_51 = arith.constant 0 : index
      %c0_52 = arith.constant 0 : index
      %79 = vector.load %arg3[%c0_51, %c0_52] : memref<16x128xf32, #tpu.memory_space<vmem>>, vector<16x128xf32>
      %80 = vector.broadcast %cst : f32 to vector<16x128xf32>
      %81 = arith.mulf %78, %80 : vector<16x128xf32>
      %c0_53 = arith.constant 0 : index
      %c0_54 = arith.constant 0 : index
      %82 = vector.load %arg11[%c0_53, %c0_54] : memref<16x128xf32, #tpu.memory_space<vmem>>, vector<16x128xf32>
      tpu.vector_store %arg11[%c0_53, %c0_54], %81 {strides = array<i32>} : memref<16x128xf32, #tpu.memory_space<vmem>>, vector<16x128xf32>,
      %83 = vector.broadcast %cst : f32 to vector<16x128xf32>
      %84 = arith.mulf %79, %83 : vector<16x128xf32>
      %c0_55 = arith.constant 0 : index
      %c0_56 = arith.constant 0 : index
      %85 = vector.load %arg12[%c0_55, %c0_56] : memref<16x128xf32, #tpu.memory_space<vmem>>, vector<16x128xf32>
      tpu.vector_store %arg12[%c0_55, %c0_56], %84 {strides = array<i32>} : memref<16x128xf32, #tpu.memory_space<vmem>>, vector<16x128xf32>,
      %cst_57 = arith.constant -1.000000e+30 : f32
      %86 = vector.broadcast %cst_57 : f32 to vector<16x1xf32>
      %c0_58 = arith.constant 0 : index
      %c0_59 = arith.constant 0 : index
      %87 = vector.load %arg13[%c0_58, %c0_59] : memref<16x1xf32, #tpu.memory_space<vmem>>, vector<16x1xf32>
      tpu.vector_store %arg13[%c0_58, %c0_59], %86 {strides = array<i32>} : memref<16x1xf32, #tpu.memory_space<vmem>>, vector<16x1xf32>,
      %cst_60 = arith.constant 0.000000e+00 : f32
      %88 = vector.broadcast %cst_60 : f32 to vector<16x1xf32>
      %c0_61 = arith.constant 0 : index
      %c0_62 = arith.constant 0 : index
      %89 = vector.load %arg14[%c0_61, %c0_62] : memref<16x1xf32, #tpu.memory_space<vmem>>, vector<16x1xf32>
      tpu.vector_store %arg14[%c0_61, %c0_62], %88 {strides = array<i32>} : memref<16x1xf32, #tpu.memory_space<vmem>>, vector<16x1xf32>,
      %c0_63 = arith.constant 0 : index
      %c0_64 = arith.constant 0 : index
      %90 = vector.load %arg4[%c0_63, %c0_64] : memref<16x128xbf16, #tpu.memory_space<vmem>>, vector<16x128xbf16>
      %91 = arith.extf %90 : vector<16x128xbf16> to vector<16x128xf32>
      %c0_65 = arith.constant 0 : index
      %c0_66 = arith.constant 0 : index
      %92 = vector.load %arg5[%c0_65, %c0_66] : memref<16x128xbf16, #tpu.memory_space<vmem>>, vector<16x128xbf16>
      %93 = arith.extf %92 : vector<16x128xbf16> to vector<16x128xf32>
      %94 = arith.mulf %91, %93 : vector<16x128xf32>
      %cst_67 = arith.constant dense<0.000000e+00> : vector<16xf32>
      %95 = vector.multi_reduction <add>, %94, %cst_67 [1] : vector<16x128xf32> to vector<16xf32>
      %96 = vector.shape_cast %95 : vector<16xf32> to vector<16x1xf32>
      %cst_68 = arith.constant 0.000000e+00 : f32
      %97 = vector.broadcast %cst_68 : f32 to vector<16x1xf32>
      %98 = arith.subf %96, %97 : vector<16x1xf32>
      %c0_69 = arith.constant 0 : index
      %c0_70 = arith.constant 0 : index
      %99 = vector.load %arg15[%c0_69, %c0_70] : memref<16x1xf32, #tpu.memory_space<vmem>>, vector<16x1xf32>
      tpu.vector_store %arg15[%c0_69, %c0_70], %98 {strides = array<i32>} : memref<16x1xf32, #tpu.memory_space<vmem>>, vector<16x1xf32>,
      %c0_71 = arith.constant 0 : index
      %c0_72 = arith.constant 0 : index
      %100 = vector.load %arg11[%c0_71, %c0_72] : memref<16x128xf32, #tpu.memory_space<vmem>>, vector<16x128xf32>
      %101 = arith.mulf %100, %79 : vector<16x128xf32>
      %cst_73 = arith.constant dense<0.000000e+00> : vector<16xf32>
      %102 = vector.multi_reduction <add>, %101, %cst_73 [1] : vector<16x128xf32> to vector<16xf32>
      %103 = vector.shape_cast %102 : vector<16xf32> to vector<16x1xf32>
      %c0_74 = arith.constant 0 : index
      %c0_75 = arith.constant 0 : index
      %104 = vector.load %arg16[%c0_74, %c0_75] : memref<16x1xf32, #tpu.memory_space<vmem>>, vector<16x1xf32>
      tpu.vector_store %arg16[%c0_74, %c0_75], %103 {strides = array<i32>} : memref<16x1xf32, #tpu.memory_space<vmem>>, vector<16x1xf32>,
      %c16_i32_76 = arith.constant 16 : i32
      %105 = arith.muli %arg0, %c16_i32_76 : i32
      %106 = tpu.iota {dimensions = array<i32: 0>} : vector<16x1xi32>
      %107 = vector.broadcast %105 : i32 to vector<16x1xi32>
      %108 = arith.addi %107, %106 : vector<16x1xi32>
      %c0_77 = arith.constant 0 : index
      %c0_78 = arith.constant 0 : index
      %109 = vector.load %arg17[%c0_77, %c0_78] : memref<16x1xi32, #tpu.memory_space<vmem>>, vector<16x1xi32>
      tpu.vector_store %arg17[%c0_77, %c0_78], %108 {strides = array<i32>} : memref<16x1xi32, #tpu.memory_space<vmem>>, vector<16x1xi32>,
    } else {
    }
    %c0 = arith.constant 0 : index
    %c0_1 = arith.constant 0 : index
    %3 = vector.load %arg15[%c0, %c0_1] : memref<16x1xf32, #tpu.memory_space<vmem>>, vector<16x1xf32>
    %c0_2 = arith.constant 0 : index
    %c0_3 = arith.constant 0 : index
    %4 = vector.load %arg11[%c0_2, %c0_3] : memref<16x128xf32, #tpu.memory_space<vmem>>, vector<16x128xf32>
    %c0_4 = arith.constant 0 : index
    %c0_5 = arith.constant 0 : index
    %5 = vector.load %arg12[%c0_4, %c0_5] : memref<16x128xf32, #tpu.memory_space<vmem>>, vector<16x128xf32>
    %c0_6 = arith.constant 0 : index
    %c0_7 = arith.constant 0 : index
    %6 = vector.load %arg4[%c0_6, %c0_7] : memref<16x128xbf16, #tpu.memory_space<vmem>>, vector<16x128xbf16>
    %c0_8 = arith.constant 0 : index
    %c0_9 = arith.constant 0 : index
    %7 = vector.load %arg5[%c0_8, %c0_9] : memref<16x128xbf16, #tpu.memory_space<vmem>>, vector<16x128xbf16>
    %8 = tpu.iota {dimensions = array<i32: 1>} : vector<16x16xi32>
    %c0_10 = arith.constant 0 : index
    %c0_11 = arith.constant 0 : index
    %9 = vector.load %arg17[%c0_10, %c0_11] : memref<16x1xi32, #tpu.memory_space<vmem>>, vector<16x1xi32>
    %c16_i32 = arith.constant 16 : i32
    %10 = arith.muli %arg1, %c16_i32 : i32
    %11 = vector.broadcast %10 : i32 to vector<16x1xi32>
    %12 = arith.subi %9, %11 : vector<16x1xi32>
    %13 = vector.broadcast %12 : vector<16x1xi32> to vector<16x16xi32>
    %14 = arith.cmpi eq, %8, %13 : vector<16x16xi32>
    %c0_12 = arith.constant 0 : index
    %c0_13 = arith.constant 0 : index
    %15 = vector.load %arg6[%c0_12, %c0_13] : memref<16x128xf32, #tpu.memory_space<vmem>>, vector<16x128xf32>
    %cst_14 = arith.constant dense<0.000000e+00> : vector<16x16xf32>
    %16 = tpu.matmul %4, %15, %cst_14 {dimension_numbers = #tpu.dot_dimension_numbers<[1], [1], [0], [0], [0, 0, 1, 0], [], []>} : vector<16x128xf32>, vector<16x128xf32>, vector<16x16xf32> -> vector<16x16xf32>
    %c0_15 = arith.constant 0 : index
    %c0_16 = arith.constant 0 : index
    %17 = vector.load %arg8[%c0_15, %c0_16] : memref<16x128xbf16, #tpu.memory_space<vmem>>, vector<16x128xbf16>
    %cst_17 = arith.constant dense<0.000000e+00> : vector<16x16xf32>
    %18 = tpu.matmul %6, %17, %cst_17 {dimension_numbers = #tpu.dot_dimension_numbers<[1], [1], [0], [0], [0, 0, 1, 0], [], []>} : vector<16x128xbf16>, vector<16x128xbf16>, vector<16x16xf32> -> vector<16x16xf32>
    %19 = vector.broadcast %3 : vector<16x1xf32> to vector<16x16xf32>
    %20 = arith.cmpf ogt, %18, %19 : vector<16x16xf32>
    %cst_18 = arith.constant dense<true> : vector<16x16xi1>
    %21 = arith.xori %14, %cst_18 : vector<16x16xi1>
    %22 = arith.andi %20, %21 : vector<16x16xi1>
    %cst_19 = arith.constant 0xFF800000 : f32
    %23 = vector.broadcast %cst_19 : f32 to vector<16x16xf32>
    %24 = arith.select %22, %23, %16 : vector<16x16xi1>, vector<16x16xf32>
    %cst_20 = arith.constant dense<0xFF800000> : vector<16xf32>
    %25 = vector.multi_reduction <maximumf>, %24, %cst_20 [1] : vector<16x16xf32> to vector<16xf32>
    %26 = vector.shape_cast %25 : vector<16xf32> to vector<16x1xf32>
    %c0_21 = arith.constant 0 : index
    %c0_22 = arith.constant 0 : index
    %27 = vector.load %arg7[%c0_21, %c0_22] : memref<16x128xf32, #tpu.memory_space<vmem>>, vector<16x128xf32>
    %cst_23 = arith.constant dense<0.000000e+00> : vector<16x16xf32>
    %28 = tpu.matmul %4, %27, %cst_23 {dimension_numbers = #tpu.dot_dimension_numbers<[1], [1], [0], [0], [0, 0, 1, 0], [], []>} : vector<16x128xf32>, vector<16x128xf32>, vector<16x16xf32> -> vector<16x16xf32>
    %c0_24 = arith.constant 0 : index
    %c0_25 = arith.constant 0 : index
    %29 = vector.load %arg9[%c0_24, %c0_25] : memref<16x128xbf16, #tpu.memory_space<vmem>>, vector<16x128xbf16>
    %cst_26 = arith.constant dense<0.000000e+00> : vector<16x16xf32>
    %30 = tpu.matmul %6, %29, %cst_26 {dimension_numbers = #tpu.dot_dimension_numbers<[1], [1], [0], [0], [0, 0, 1, 0], [], []>} : vector<16x128xbf16>, vector<16x128xbf16>, vector<16x16xf32> -> vector<16x16xf32>
    %31 = vector.broadcast %3 : vector<16x1xf32> to vector<16x16xf32>
    %32 = arith.cmpf ogt, %30, %31 : vector<16x16xf32>
    %cst_27 = arith.constant 0xFF800000 : f32
    %33 = vector.broadcast %cst_27 : f32 to vector<16x16xf32>
    %34 = arith.select %32, %33, %28 : vector<16x16xi1>, vector<16x16xf32>
    %cst_28 = arith.constant dense<0xFF800000> : vector<16xf32>
    %35 = vector.multi_reduction <maximumf>, %34, %cst_28 [1] : vector<16x16xf32> to vector<16xf32>
    %36 = vector.shape_cast %35 : vector<16xf32> to vector<16x1xf32>
    %37 = arith.maximumf %26, %36 : vector<16x1xf32>
    %c0_29 = arith.constant 0 : index
    %c0_30 = arith.constant 0 : index
    %38 = vector.load %arg6[%c0_29, %c0_30] : memref<16x128xf32, #tpu.memory_space<vmem>>, vector<16x128xf32>
    %cst_31 = arith.constant dense<0.000000e+00> : vector<16x16xf32>
    %39 = tpu.matmul %5, %38, %cst_31 {dimension_numbers = #tpu.dot_dimension_numbers<[1], [1], [0], [0], [0, 0, 1, 0], [], []>} : vector<16x128xf32>, vector<16x128xf32>, vector<16x16xf32> -> vector<16x16xf32>
    %c0_32 = arith.constant 0 : index
    %c0_33 = arith.constant 0 : index
    %40 = vector.load %arg8[%c0_32, %c0_33] : memref<16x128xbf16, #tpu.memory_space<vmem>>, vector<16x128xbf16>
    %cst_34 = arith.constant dense<0.000000e+00> : vector<16x16xf32>
    %41 = tpu.matmul %7, %40, %cst_34 {dimension_numbers = #tpu.dot_dimension_numbers<[1], [1], [0], [0], [0, 0, 1, 0], [], []>} : vector<16x128xbf16>, vector<16x128xbf16>, vector<16x16xf32> -> vector<16x16xf32>
    %42 = vector.broadcast %3 : vector<16x1xf32> to vector<16x16xf32>
    %43 = arith.cmpf ogt, %41, %42 : vector<16x16xf32>
    %cst_35 = arith.constant 0xFF800000 : f32
    %44 = vector.broadcast %cst_35 : f32 to vector<16x16xf32>
    %45 = arith.select %43, %44, %39 : vector<16x16xi1>, vector<16x16xf32>
    %cst_36 = arith.constant dense<0xFF800000> : vector<16xf32>
    %46 = vector.multi_reduction <maximumf>, %45, %cst_36 [1] : vector<16x16xf32> to vector<16xf32>
    %47 = vector.shape_cast %46 : vector<16xf32> to vector<16x1xf32>
    %48 = arith.maximumf %37, %47 : vector<16x1xf32>
    %c0_37 = arith.constant 0 : index
    %c0_38 = arith.constant 0 : index
    %49 = vector.load %arg13[%c0_37, %c0_38] : memref<16x1xf32, #tpu.memory_space<vmem>>, vector<16x1xf32>
    %50 = arith.maximumf %49, %48 : vector<16x1xf32>
    %51 = arith.subf %49, %50 : vector<16x1xf32>
    %52 = math.exp %51 : vector<16x1xf32>
    %c0_39 = arith.constant 0 : index
    %c0_40 = arith.constant 0 : index
    %53 = vector.load %arg14[%c0_39, %c0_40] : memref<16x1xf32, #tpu.memory_space<vmem>>, vector<16x1xf32>
    %54 = arith.mulf %52, %53 : vector<16x1xf32>
    %55 = vector.broadcast %50 : vector<16x1xf32> to vector<16x16xf32>
    %56 = arith.subf %24, %55 : vector<16x16xf32>
    %57 = math.exp %56 : vector<16x16xf32>
    %cst_41 = arith.constant dense<0.000000e+00> : vector<16xf32>
    %58 = vector.multi_reduction <add>, %57, %cst_41 [1] : vector<16x16xf32> to vector<16xf32>
    %59 = vector.shape_cast %58 : vector<16xf32> to vector<16x1xf32>
    %60 = arith.addf %54, %59 : vector<16x1xf32>
    %61 = vector.broadcast %50 : vector<16x1xf32> to vector<16x16xf32>
    %62 = arith.subf %34, %61 : vector<16x16xf32>
    %63 = math.exp %62 : vector<16x16xf32>
    %cst_42 = arith.constant dense<0.000000e+00> : vector<16xf32>
    %64 = vector.multi_reduction <add>, %63, %cst_42 [1] : vector<16x16xf32> to vector<16xf32>
    %65 = vector.shape_cast %64 : vector<16xf32> to vector<16x1xf32>
    %66 = arith.addf %60, %65 : vector<16x1xf32>
    %67 = vector.broadcast %50 : vector<16x1xf32> to vector<16x16xf32>
    %68 = arith.subf %45, %67 : vector<16x16xf32>
    %69 = math.exp %68 : vector<16x16xf32>
    %cst_43 = arith.constant dense<0.000000e+00> : vector<16xf32>
    %70 = vector.multi_reduction <add>, %69, %cst_43 [1] : vector<16x16xf32> to vector<16xf32>
    %71 = vector.shape_cast %70 : vector<16xf32> to vector<16x1xf32>
    %72 = arith.addf %66, %71 : vector<16x1xf32>
    %c0_44 = arith.constant 0 : index
    %c0_45 = arith.constant 0 : index
    %73 = vector.load %arg14[%c0_44, %c0_45] : memref<16x1xf32, #tpu.memory_space<vmem>>, vector<16x1xf32>
    tpu.vector_store %arg14[%c0_44, %c0_45], %72 {strides = array<i32>} : memref<16x1xf32, #tpu.memory_space<vmem>>, vector<16x1xf32>,
    %c0_46 = arith.constant 0 : index
    %c0_47 = arith.constant 0 : index
    %74 = vector.load %arg13[%c0_46, %c0_47] : memref<16x1xf32, #tpu.memory_space<vmem>>, vector<16x1xf32>
    tpu.vector_store %arg13[%c0_46, %c0_47], %50 {strides = array<i32>} : memref<16x1xf32, #tpu.memory_space<vmem>>, vector<16x1xf32>,
    %c1_i32 = arith.constant 1 : i32
    %75 = arith.cmpi eq, %arg1, %c1_i32 : i32
    %76 = arith.extui %75 : i1 to i32
    %c0_i32_48 = arith.constant 0 : i32
    %77 = arith.cmpi ne, %76, %c0_i32_48 : i32
    scf.if %77 {
      %c0_49 = arith.constant 0 : index
      %c0_50 = arith.constant 0 : index
      %78 = vector.load %arg13[%c0_49, %c0_50] : memref<16x1xf32, #tpu.memory_space<vmem>>, vector<16x1xf32>
      %c0_51 = arith.constant 0 : index
      %c0_52 = arith.constant 0 : index
      %79 = vector.load %arg14[%c0_51, %c0_52] : memref<16x1xf32, #tpu.memory_space<vmem>>, vector<16x1xf32>
      %80 = math.log %79 : vector<16x1xf32>
      %81 = arith.addf %78, %80 : vector<16x1xf32>
      %c0_53 = arith.constant 0 : index
      %c0_54 = arith.constant 0 : index
      %82 = vector.load %arg16[%c0_53, %c0_54] : memref<16x1xf32, #tpu.memory_space<vmem>>, vector<16x1xf32>
      %83 = arith.subf %81, %82 : vector<16x1xf32>
      %c0_55 = arith.constant 0 : index
      %c0_56 = arith.constant 0 : index
      %84 = vector.load %arg10[%c0_55, %c0_56] : memref<16x1xf32, #tpu.memory_space<vmem>>, vector<16x1xf32>
      tpu.vector_store %arg10[%c0_55, %c0_56], %83 {strides = array<i32>} : memref<16x1xf32, #tpu.memory_space<vmem>>, vector<16x1xf32>,
    } else {
    }
    return
  }
  func.func @transform_0(%arg0: i32, %arg1: i32) -> (i32, i32) {
    %c0_i32 = arith.constant 0 : i32
    %c0_i32_0 = arith.constant 0 : i32
    return %arg0, %c0_i32 : i32, i32
  }
  func.func @transform_1(%arg0: i32, %arg1: i32) -> (i32, i32) {
    %c0_i32 = arith.constant 0 : i32
    %c0_i32_0 = arith.constant 0 : i32
    return %arg0, %c0_i32 : i32, i32
  }
  func.func @transform_2(%arg0: i32, %arg1: i32) -> (i32, i32) {
    %c0_i32 = arith.constant 0 : i32
    %c0_i32_0 = arith.constant 0 : i32
    return %arg0, %c0_i32 : i32, i32
  }
  func.func @transform_3(%arg0: i32, %arg1: i32) -> (i32, i32) {
    %c0_i32 = arith.constant 0 : i32
    %c0_i32_0 = arith.constant 0 : i32
    return %arg0, %c0_i32 : i32, i32
  }
  func.func @transform_4(%arg0: i32, %arg1: i32) -> (i32, i32) {
    %c0_i32 = arith.constant 0 : i32
    %c0_i32_0 = arith.constant 0 : i32
    return %arg1, %c0_i32 : i32, i32
  }
  func.func @transform_5(%arg0: i32, %arg1: i32) -> (i32, i32) {
    %c0_i32 = arith.constant 0 : i32
    %c0_i32_0 = arith.constant 0 : i32
    return %arg1, %c0_i32 : i32, i32
  }
  func.func @transform_6(%arg0: i32, %arg1: i32) -> (i32, i32) {
    %c0_i32 = arith.constant 0 : i32
    %c0_i32_0 = arith.constant 0 : i32
    return %arg1, %c0_i32 : i32, i32
  }
  func.func @transform_7(%arg0: i32, %arg1: i32) -> (i32, i32) {
    %c0_i32 = arith.constant 0 : i32
    %c0_i32_0 = arith.constant 0 : i32
    return %arg1, %c0_i32 : i32, i32
  }
  func.func @transform_8(%arg0: i32, %arg1: i32) -> (i32, i32) {
    %c0_i32 = arith.constant 0 : i32
    %c0_i32_0 = arith.constant 0 : i32
    return %arg0, %c0_i32 : i32, i32
  }
}

</mosaic_0001>

<llo_original>
// kernel: cached_gist_embed_loss.1
$region0: #{cached_gist_embed_loss.1}
  #allocation0 [shape = 'u32[]', space=smem, size = 0x4, offset = 0x4, fixed_abs, tag = 'smem constant byte address 0x4 - core index']
  #allocation1 [shape = 'u32[144,128]{1,0:T(1,128)}', space=vmem, size = 0x12000, scoped, tag = 'internal scratch']
  #allocation2 [shape = 'f32[16,128]{1,0:T(8,128)}', space=vmem, size = 0x2000, scoped, tag = 'scratch operand']
  #allocation3 [shape = 'f32[16,128]{1,0:T(8,128)}', space=vmem, size = 0x2000, scoped, tag = 'scratch operand']
  #allocation4 [shape = 'f32[16,1]{1,0:T(8,128)}', space=vmem, size = 0x2000, scoped, tag = 'scratch operand']
  #allocation5 [shape = 'f32[16,1]{1,0:T(8,128)}', space=vmem, size = 0x2000, scoped, tag = 'scratch operand']
  #allocation6 [shape = 'f32[16,1]{1,0:T(8,128)}', space=vmem, size = 0x2000, scoped, tag = 'scratch operand']
  #allocation7 [shape = 'f32[16,1]{1,0:T(8,128)}', space=vmem, size = 0x2000, scoped, tag = 'scratch operand']
  #allocation8 [shape = 's32[16,1]{1,0:T(8,128)}', space=vmem, size = 0x2000, scoped, tag = 'scratch operand']
  %s0 = inlined_call_operand.vmem [shape: f32[32,128], index: 0, kind: input, shape index: {}, may-alias: {0,5}]
  %s1 = inlined_call_operand.vmem [shape: f32[32,128], index: 1, kind: input, shape index: {}, may-alias: {1,4}]
  %s2 = inlined_call_operand.vmem [shape: bf16[32,128], index: 2, kind: input, shape index: {}, may-alias: {2,7}]
  %s3 = inlined_call_operand.vmem [shape: bf16[32,128], index: 3, kind: input, shape index: {}, may-alias: {3,6}]
  %s4 = inlined_call_operand.vmem [shape: f32[32,128], index: 4, kind: input, shape index: {}, may-alias: {1,4}]
  %s5 = inlined_call_operand.vmem [shape: f32[32,128], index: 5, kind: input, shape index: {}, may-alias: {0,5}]
  %s6 = inlined_call_operand.vmem [shape: bf16[32,128], index: 6, kind: input, shape index: {}, may-alias: {3,6}]
  %s7 = inlined_call_operand.vmem [shape: bf16[32,128], index: 7, kind: input, shape index: {}, may-alias: {2,7}]
  %s8 = inlined_call_operand.vmem [shape: f32[32,1], index: 8, kind: output, shape index: {}]
  %s9 = sld [smem:[#allocation0]]
  $region73: #{cached_gist_embed_loss.1} parent=0
    _
  %s11 = ssub.s32 1, %s9
  %s12 = scalar_select 0, %s11, %s9
  loop: start=0, step=1, limit=6
  $region2: #{cached_gist_embed_loss.1} parent=0 // loop_pre_header
    _
  $region3: #{cached_gist_embed_loss.1} parent=0 // loop_header
    %s14 = sphi 0, %s18
    %p15 = scmp.ge.s32.totalorder %s14, 6
    %s21 = sphi 0, %s33
    %s22 = sphi 0, %s29
    %s23 = sphi 0, %s21
    %s24 = sphi 0, %s22
    %s25 = sphi 0, %s23
    %s26 = sphi 0, %s24
    %s36 = sphi 0, %s38
    %s39 = sphi 0, %s36
    %s40 = sphi 0, %s39
    %s56 = sphi 0, %s40
    %s62 = sphi 0, %s64
    %s65 = sphi 0, %s62
    %s66 = sphi 0, %s65
    %s82 = sphi 0, %s66
    %s88 = sphi 0, %s90
    %s91 = sphi 0, %s88
    %s92 = sphi 0, %s91
    %s108 = sphi 0, %s92
    %s114 = sphi 0, %s116
    %s117 = sphi 0, %s114
    %s118 = sphi 0, %s117
    %s134 = sphi 0, %s118
    %s140 = sphi 0, %s142
    %s143 = sphi 0, %s140
    %s144 = sphi 0, %s143
    %s160 = sphi 0, %s144
    %s166 = sphi 0, %s168
    %s169 = sphi 0, %s166
    %s170 = sphi 0, %s169
    %s186 = sphi 0, %s170
    %s192 = sphi 0, %s194
    %s195 = sphi 0, %s192
    %s196 = sphi 0, %s195
    %s212 = sphi 0, %s196
    %s218 = sphi 0, %s220
    %s221 = sphi 0, %s218
    %s222 = sphi 0, %s221
    %s238 = sphi 0, %s222
    %s244 = sphi 0, %s246
    %s247 = sphi 0, %s244
    %s248 = sphi 0, %s247
    %s264 = sphi 0, %s248
  $region4: #{cached_gist_embed_loss.1} parent=0 // loop_header_branch
    %17 = sbr.rel (%p15) target = $region8
  $region5: #{cached_gist_embed_loss.1} parent=0 // loop_body
    %s19 = ssub.s32 %s14, 1
    %s20 = ssub.s32 %s14, 2
    %s27 = sadd.s32 1, %s22
    %p28 = scmp.ge.s32.totalorder %s27, 2
    %s29 = scalar_select %p28, 0, %s27
    %s30 = sadd.s32 1, %s21
    %s31 = scalar_select %p28, %s30, %s21
    %p32 = scmp.ge.s32.totalorder %s31, 2
    %s33 = scalar_select %p32, 0, %s31
    %s34 = ssub.s32 %s21, %s33
    %p35 = scmp.eq.s32.totalorder %s34, 0
    %s37 = sadd.s32 %s36, 1
    %s38 = scalar_select %p35, %s36, %s37
    %p41 = pneg %p35
    %p42 = scmp.eq.s32.totalorder %s14, 3
    %p43 = por %p41, %p42
    %p44 = scmp.ne.s32.totalorder %s36, %s39
    %p45 = scmp.eq.s32.totalorder %s14, 0
    %p46 = por %p44, %p45
    %p47 = scmp.ne.s32.totalorder %s36, %s39
    %p48 = scmp.eq.s32.totalorder %s19, 3
    %p49 = por %p47, %p48
    %p50 = scmp.ne.s32.totalorder %s39, %s40
    %p51 = scmp.eq.s32.totalorder %s19, 0
    %p52 = por %p50, %p51
    %p53 = scmp.ne.s32.totalorder %s39, %s40
    %p54 = scmp.eq.s32.totalorder %s20, 3
    %p55 = por %p53, %p54
    %p57 = scmp.ne.s32.totalorder %s40, %s56
    %p58 = scmp.eq.s32.totalorder %s20, 0
    %p59 = por %p57, %p58
    %s60 = ssub.s32 %s21, %s33
    %p61 = scmp.eq.s32.totalorder %s60, 0
    %s63 = sadd.s32 %s62, 1
    %s64 = scalar_select %p61, %s62, %s63
    %p67 = pneg %p61
    %p68 = scmp.eq.s32.totalorder %s14, 3
    %p69 = por %p67, %p68
    %p70 = scmp.ne.s32.totalorder %s62, %s65
    %p71 = scmp.eq.s32.totalorder %s14, 0
    %p72 = por %p70, %p71
    %p73 = scmp.ne.s32.totalorder %s62, %s65
    %p74 = scmp.eq.s32.totalorder %s19, 3
    %p75 = por %p73, %p74
    %p76 = scmp.ne.s32.totalorder %s65, %s66
    %p77 = scmp.eq.s32.totalorder %s19, 0
    %p78 = por %p76, %p77
    %p79 = scmp.ne.s32.totalorder %s65, %s66
    %p80 = scmp.eq.s32.totalorder %s20, 3
    %p81 = por %p79, %p80
    %p83 = scmp.ne.s32.totalorder %s66, %s82
    %p84 = scmp.eq.s32.totalorder %s20, 0
    %p85 = por %p83, %p84
    %s86 = ssub.s32 %s21, %s33
    %p87 = scmp.eq.s32.totalorder %s86, 0
    %s89 = sadd.s32 %s88, 1
    %s90 = scalar_select %p87, %s88, %s89
    %p93 = pneg %p87
    %p94 = scmp.eq.s32.totalorder %s14, 3
    %p95 = por %p93, %p94
    %p96 = scmp.ne.s32.totalorder %s88, %s91
    %p97 = scmp.eq.s32.totalorder %s14, 0
    %p98 = por %p96, %p97
    %p99 = scmp.ne.s32.totalorder %s88, %s91
    %p100 = scmp.eq.s32.totalorder %s19, 3
    %p101 = por %p99, %p100
    %p102 = scmp.ne.s32.totalorder %s91, %s92
    %p103 = scmp.eq.s32.totalorder %s19, 0
    %p104 = por %p102, %p103
    %p105 = scmp.ne.s32.totalorder %s91, %s92
    %p106 = scmp.eq.s32.totalorder %s20, 3
    %p107 = por %p105, %p106
    %p109 = scmp.ne.s32.totalorder %s92, %s108
    %p110 = scmp.eq.s32.totalorder %s20, 0
    %p111 = por %p109, %p110
    %s112 = ssub.s32 %s21, %s33
    %p113 = scmp.eq.s32.totalorder %s112, 0
    %s115 = sadd.s32 %s114, 1
    %s116 = scalar_select %p113, %s114, %s115
    %p119 = pneg %p113
    %p120 = scmp.eq.s32.totalorder %s14, 3
    %p121 = por %p119, %p120
    %p122 = scmp.ne.s32.totalorder %s114, %s117
    %p123 = scmp.eq.s32.totalorder %s14, 0
    %p124 = por %p122, %p123
    %p125 = scmp.ne.s32.totalorder %s114, %s117
    %p126 = scmp.eq.s32.totalorder %s19, 3
    %p127 = por %p125, %p126
    %p128 = scmp.ne.s32.totalorder %s117, %s118
    %p129 = scmp.eq.s32.totalorder %s19, 0
    %p130 = por %p128, %p129
    %p131 = scmp.ne.s32.totalorder %s117, %s118
    %p132 = scmp.eq.s32.totalorder %s20, 3
    %p133 = por %p131, %p132
    %p135 = scmp.ne.s32.totalorder %s118, %s134
    %p136 = scmp.eq.s32.totalorder %s20, 0
    %p137 = por %p135, %p136
    %s138 = ssub.s32 %s22, %s29
    %p139 = scmp.eq.s32.totalorder %s138, 0
    %s141 = sadd.s32 %s140, 1
    %s142 = scalar_select %p139, %s140, %s141
    %p145 = pneg %p139
    %p146 = scmp.eq.s32.totalorder %s14, 3
    %p147 = por %p145, %p146
    %p148 = scmp.ne.s32.totalorder %s140, %s143
    %p149 = scmp.eq.s32.totalorder %s14, 0
    %p150 = por %p148, %p149
    %p151 = scmp.ne.s32.totalorder %s140, %s143
    %p152 = scmp.eq.s32.totalorder %s19, 3
    %p153 = por %p151, %p152
    %p154 = scmp.ne.s32.totalorder %s143, %s144
    %p155 = scmp.eq.s32.totalorder %s19, 0
    %p156 = por %p154, %p155
    %p157 = scmp.ne.s32.totalorder %s143, %s144
    %p158 = scmp.eq.s32.totalorder %s20, 3
    %p159 = por %p157, %p158
    %p161 = scmp.ne.s32.totalorder %s144, %s160
    %p162 = scmp.eq.s32.totalorder %s20, 0
    %p163 = por %p161, %p162
    %s164 = ssub.s32 %s22, %s29
    %p165 = scmp.eq.s32.totalorder %s164, 0
    %s167 = sadd.s32 %s166, 1
    %s168 = scalar_select %p165, %s166, %s167
    %p171 = pneg %p165
    %p172 = scmp.eq.s32.totalorder %s14, 3
    %p173 = por %p171, %p172
    %p174 = scmp.ne.s32.totalorder %s166, %s169
    %p175 = scmp.eq.s32.totalorder %s14, 0
    %p176 = por %p174, %p175
    %p177 = scmp.ne.s32.totalorder %s166, %s169
    %p178 = scmp.eq.s32.totalorder %s19, 3
    %p179 = por %p177, %p178
    %p180 = scmp.ne.s32.totalorder %s169, %s170
    %p181 = scmp.eq.s32.totalorder %s19, 0
    %p182 = por %p180, %p181
    %p183 = scmp.ne.s32.totalorder %s169, %s170
    %p184 = scmp.eq.s32.totalorder %s20, 3
    %p185 = por %p183, %p184
    %p187 = scmp.ne.s32.totalorder %s170, %s186
    %p188 = scmp.eq.s32.totalorder %s20, 0
    %p189 = por %p187, %p188
    %s190 = ssub.s32 %s22, %s29
    %p191 = scmp.eq.s32.totalorder %s190, 0
    %s193 = sadd.s32 %s192, 1
    %s194 = scalar_select %p191, %s192, %s193
    %p197 = pneg %p191
    %p198 = scmp.eq.s32.totalorder %s14, 3
    %p199 = por %p197, %p198
    %p200 = scmp.ne.s32.totalorder %s192, %s195
    %p201 = scmp.eq.s32.totalorder %s14, 0
    %p202 = por %p200, %p201
    %p203 = scmp.ne.s32.totalorder %s192, %s195
    %p204 = scmp.eq.s32.totalorder %s19, 3
    %p205 = por %p203, %p204
    %p206 = scmp.ne.s32.totalorder %s195, %s196
    %p207 = scmp.eq.s32.totalorder %s19, 0
    %p208 = por %p206, %p207
    %p209 = scmp.ne.s32.totalorder %s195, %s196
    %p210 = scmp.eq.s32.totalorder %s20, 3
    %p211 = por %p209, %p210
    %p213 = scmp.ne.s32.totalorder %s196, %s212
    %p214 = scmp.eq.s32.totalorder %s20, 0
    %p215 = por %p213, %p214
    %s216 = ssub.s32 %s22, %s29
    %p217 = scmp.eq.s32.totalorder %s216, 0
    %s219 = sadd.s32 %s218, 1
    %s220 = scalar_select %p217, %s218, %s219
    %p223 = pneg %p217
    %p224 = scmp.eq.s32.totalorder %s14, 3
    %p225 = por %p223, %p224
    %p226 = scmp.ne.s32.totalorder %s218, %s221
    %p227 = scmp.eq.s32.totalorder %s14, 0
    %p228 = por %p226, %p227
    %p229 = scmp.ne.s32.totalorder %s218, %s221
    %p230 = scmp.eq.s32.totalorder %s19, 3
    %p231 = por %p229, %p230
    %p232 = scmp.ne.s32.totalorder %s221, %s222
    %p233 = scmp.eq.s32.totalorder %s19, 0
    %p234 = por %p232, %p233
    %p235 = scmp.ne.s32.totalorder %s221, %s222
    %p236 = scmp.eq.s32.totalorder %s20, 3
    %p237 = por %p235, %p236
    %p239 = scmp.ne.s32.totalorder %s222, %s238
    %p240 = scmp.eq.s32.totalorder %s20, 0
    %p241 = por %p239, %p240
    %s242 = ssub.s32 %s21, %s33
    %p243 = scmp.eq.s32.totalorder %s242, 0
    %s245 = sadd.s32 %s244, 1
    %s246 = scalar_select %p243, %s244, %s245
    %p249 = pneg %p243
    %p250 = scmp.eq.s32.totalorder %s14, 3
    %p251 = por %p249, %p250
    %p252 = scmp.ne.s32.totalorder %s244, %s247
    %p253 = scmp.eq.s32.totalorder %s14, 0
    %p254 = por %p252, %p253
    %p255 = scmp.ne.s32.totalorder %s244, %s247
    %p256 = scmp.eq.s32.totalorder %s19, 3
    %p257 = por %p255, %p256
    %p258 = scmp.ne.s32.totalorder %s247, %s248
    %p259 = scmp.eq.s32.totalorder %s19, 0
    %p260 = por %p258, %p259
    %p261 = scmp.ne.s32.totalorder %s247, %s248
    %p262 = scmp.eq.s32.totalorder %s20, 3
    %p263 = por %p261, %p262
    %p265 = scmp.ne.s32.totalorder %s248, %s264
    %p266 = scmp.eq.s32.totalorder %s20, 0
    %p267 = por %p265, %p266
    %p268 = scmp.le.s32.totalorder 1, %s14
    %p269 = scmp.lt.s32.totalorder %s14, 5
    %p270 = pnand %p268, %p269
    %p271 = pneg %p270
    // Predicated region
    $region9: #{cached_gist_embed_loss.1} parent=5 // pred_check
      _
    $region10: #{cached_gist_embed_loss.1} parent=5 // pred_check_branch
      %273 = sbr.rel (%p270) target = $region12
    $region11: #{cached_gist_embed_loss.1} parent=5 // pred_region
      %s274 = ssub.s32 %s14, 1
    $region12: #{cached_gist_embed_loss.1} parent=5 // pred_fallthru
      _
    %p275 = scmp.lt.s32.totalorder %s14, 4
    // Predicated region
    $region13: #{cached_gist_embed_loss.1} parent=5 // pred_check
      %p276 = pneg %p275
    $region14: #{cached_gist_embed_loss.1} parent=5 // pred_check_branch
      %278 = sbr.rel (%p276) target = $region16
    $region15: #{cached_gist_embed_loss.1} parent=5 // pred_region
      // Predicated region
      $region17: #{cached_gist_embed_loss.1} parent=15 // pred_check
        %p279 = pneg %p46
      $region18: #{cached_gist_embed_loss.1} parent=15 // pred_check_branch
        %281 = sbr.rel (%p279) target = $region20
      $region19: #{cached_gist_embed_loss.1} parent=15 // pred_region
        %s282 = smul.u32 2, %s21
        %p283 = scmp.lt.s32.totalorder %s282, 3
        %s284 = scalar_select %p283, %s282, 3
        %s285 = smul.addr %s284, 8
        %s286 = scalar_lea.vmem %s0, %s285
        %s287 = smul.u32 2, %s21
      $region20: #{cached_gist_embed_loss.1} parent=15 // pred_fallthru
        _
      // Predicated region
      $region21: #{cached_gist_embed_loss.1} parent=15 // pred_check
        %p288 = pneg %p72
      $region22: #{cached_gist_embed_loss.1} parent=15 // pred_check_branch
        %290 = sbr.rel (%p288) target = $region24
      $region23: #{cached_gist_embed_loss.1} parent=15 // pred_region
        %s291 = smul.u32 2, %s21
        %p292 = scmp.lt.s32.totalorder %s291, 3
        %s293 = scalar_select %p292, %s291, 3
        %s294 = smul.addr %s293, 8
        %s295 = scalar_lea.vmem %s1, %s294
        %s296 = smul.u32 2, %s21
      $region24: #{cached_gist_embed_loss.1} parent=15 // pred_fallthru
        _
      // Predicated region
      $region25: #{cached_gist_embed_loss.1} parent=15 // pred_check
        %p297 = pneg %p98
      $region26: #{cached_gist_embed_loss.1} parent=15 // pred_check_branch
        %299 = sbr.rel (%p297) target = $region28
      $region27: #{cached_gist_embed_loss.1} parent=15 // pred_region
        %s300 = smul.u32 2, %s21
        %p301 = scmp.lt.s32.totalorder %s300, 3
        %s302 = scalar_select %p301, %s300, 3
        %s303 = smul.addr %s302, 4
        %s304 = scalar_lea.vmem %s2, %s303
        %s305 = smul.u32 2, %s21
      $region28: #{cached_gist_embed_loss.1} parent=15 // pred_fallthru
        _
      // Predicated region
      $region29: #{cached_gist_embed_loss.1} parent=15 // pred_check
        %p306 = pneg %p124
      $region30: #{cached_gist_embed_loss.1} parent=15 // pred_check_branch
        %308 = sbr.rel (%p306) target = $region32
      $region31: #{cached_gist_embed_loss.1} parent=15 // pred_region
        %s309 = smul.u32 2, %s21
        %p310 = scmp.lt.s32.totalorder %s309, 3
        %s311 = scalar_select %p310, %s309, 3
        %s312 = smul.addr %s311, 4
        %s313 = scalar_lea.vmem %s3, %s312
        %s314 = smul.u32 2, %s21
      $region32: #{cached_gist_embed_loss.1} parent=15 // pred_fallthru
        _
      // Predicated region
      $region33: #{cached_gist_embed_loss.1} parent=15 // pred_check
        %p315 = pneg %p150
      $region34: #{cached_gist_embed_loss.1} parent=15 // pred_check_branch
        %317 = sbr.rel (%p315) target = $region36
      $region35: #{cached_gist_embed_loss.1} parent=15 // pred_region
        %s318 = smul.u32 2, %s22
        %p319 = scmp.lt.s32.totalorder %s318, 3
        %s320 = scalar_select %p319, %s318, 3
        %s321 = smul.addr %s320, 8
        %s322 = scalar_lea.vmem %s4, %s321
        %s323 = smul.u32 2, %s22
      $region36: #{cached_gist_embed_loss.1} parent=15 // pred_fallthru
        _
      // Predicated region
      $region37: #{cached_gist_embed_loss.1} parent=15 // pred_check
        %p324 = pneg %p176
      $region38: #{cached_gist_embed_loss.1} parent=15 // pred_check_branch
        %326 = sbr.rel (%p324) target = $region40
      $region39: #{cached_gist_embed_loss.1} parent=15 // pred_region
        %s327 = smul.u32 2, %s22
        %p328 = scmp.lt.s32.totalorder %s327, 3
        %s329 = scalar_select %p328, %s327, 3
        %s330 = smul.addr %s329, 8
        %s331 = scalar_lea.vmem %s5, %s330
        %s332 = smul.u32 2, %s22
      $region40: #{cached_gist_embed_loss.1} parent=15 // pred_fallthru
        _
      // Predicated region
      $region41: #{cached_gist_embed_loss.1} parent=15 // pred_check
        %p333 = pneg %p202
      $region42: #{cached_gist_embed_loss.1} parent=15 // pred_check_branch
        %335 = sbr.rel (%p333) target = $region44
      $region43: #{cached_gist_embed_loss.1} parent=15 // pred_region
        %s336 = smul.u32 2, %s22
        %p337 = scmp.lt.s32.totalorder %s336, 3
        %s338 = scalar_select %p337, %s336, 3
        %s339 = smul.addr %s338, 4
        %s340 = scalar_lea.vmem %s6, %s339
        %s341 = smul.u32 2, %s22
      $region44: #{cached_gist_embed_loss.1} parent=15 // pred_fallthru
        _
      // Predicated region
      $region45: #{cached_gist_embed_loss.1} parent=15 // pred_check
        %p342 = pneg %p228
      $region46: #{cached_gist_embed_loss.1} parent=15 // pred_check_branch
        %344 = sbr.rel (%p342) target = $region48
      $region47: #{cached_gist_embed_loss.1} parent=15 // pred_region
        %s345 = smul.u32 2, %s22
        %p346 = scmp.lt.s32.totalorder %s345, 3
        %s347 = scalar_select %p346, %s345, 3
        %s348 = smul.addr %s347, 4
        %s349 = scalar_lea.vmem %s7, %s348
        %s350 = smul.u32 2, %s22
      $region48: #{cached_gist_embed_loss.1} parent=15 // pred_fallthru
        _
    $region16: #{cached_gist_embed_loss.1} parent=5 // pred_fallthru
      _
    %p351 = scmp.le.s32.totalorder 1, %s14
    %p352 = scmp.lt.s32.totalorder %s14, 5
    %p353 = pnand %p351, %p352
    %p354 = pneg %p353
    // Predicated region
    $region49: #{cached_gist_embed_loss.1} parent=5 // pred_check
      _
    $region50: #{cached_gist_embed_loss.1} parent=5 // pred_check_branch
      %356 = sbr.rel (%p353) target = $region52
    $region51: #{cached_gist_embed_loss.1} parent=5 // pred_region
      %s357 = ssub.s32 %s14, 1
      %s358 = smul.u32 2, %s23
      %p359 = scmp.lt.s32.totalorder %s358, 3
      %s360 = scalar_select %p359, %s358, 3
      %s361 = smul.addr %s360, 8
      %s362 = scalar_lea.vmem %s0, %s361
      %p363 = pneg %p52
      %p364 = pneg %p49
      %s365 = smul.u32 2, %s23
      %p366 = scmp.lt.s32.totalorder %s365, 3
      %s367 = scalar_select %p366, %s365, 3
      %s368 = smul.addr %s367, 8
      %s369 = scalar_lea.vmem %s1, %s368
      %p370 = pneg %p78
      %p371 = pneg %p75
      %s372 = smul.u32 2, %s23
      %p373 = scmp.lt.s32.totalorder %s372, 3
      %s374 = scalar_select %p373, %s372, 3
      %s375 = smul.addr %s374, 4
      %s376 = scalar_lea.vmem %s2, %s375
      %p377 = pneg %p104
      %p378 = pneg %p101
      %s379 = smul.u32 2, %s23
      %p380 = scmp.lt.s32.totalorder %s379, 3
      %s381 = scalar_select %p380, %s379, 3
      %s382 = smul.addr %s381, 4
      %s383 = scalar_lea.vmem %s3, %s382
      %p384 = pneg %p130
      %p385 = pneg %p127
      %s386 = smul.u32 2, %s24
      %p387 = scmp.lt.s32.totalorder %s386, 3
      %s388 = scalar_select %p387, %s386, 3
      %s389 = smul.addr %s388, 8
      %s390 = scalar_lea.vmem %s4, %s389
      %p391 = pneg %p156
      %p392 = pneg %p153
      %s393 = smul.u32 2, %s24
      %p394 = scmp.lt.s32.totalorder %s393, 3
      %s395 = scalar_select %p394, %s393, 3
      %s396 = smul.addr %s395, 8
      %s397 = scalar_lea.vmem %s5, %s396
      %p398 = pneg %p182
      %p399 = pneg %p179
      %s400 = smul.u32 2, %s24
      %p401 = scmp.lt.s32.totalorder %s400, 3
      %s402 = scalar_select %p401, %s400, 3
      %s403 = smul.addr %s402, 4
      %s404 = scalar_lea.vmem %s6, %s403
      %p405 = pneg %p208
      %p406 = pneg %p205
      %s407 = smul.u32 2, %s24
      %p408 = scmp.lt.s32.totalorder %s407, 3
      %s409 = scalar_select %p408, %s407, 3
      %s410 = smul.addr %s409, 4
      %s411 = scalar_lea.vmem %s7, %s410
      %p412 = pneg %p234
      %p413 = pneg %p231
      %p414 = pneg %p260
      %p415 = pneg %p257
      %s416 = smul.u32 2, %s23
      %p417 = scmp.lt.s32.totalorder %s416, 3
      %s418 = scalar_select %p417, %s416, 3
      %s419 = smul.addr %s418, 8
      %s420 = scalar_lea.vmem %s8, %s419
      %s421 = smul.u32 2, %s23
      %p422 = scmp.lt.s32.totalorder %s421, 3
      %s423 = scalar_select %p422, %s421, 3
      %s424 = smul.addr %s423, 8
      %s425 = scalar_lea.vmem %s0, %s424
      %s426 = smul.u32 2, %s23
      %s427 = smul.u32 2, %s23
      %p428 = scmp.lt.s32.totalorder %s427, 3
      %s429 = scalar_select %p428, %s427, 3
      %s430 = smul.addr %s429, 8
      %s431 = scalar_lea.vmem %s1, %s430
      %s432 = smul.u32 2, %s23
      %s433 = smul.u32 2, %s23
      %p434 = scmp.lt.s32.totalorder %s433, 3
      %s435 = scalar_select %p434, %s433, 3
      %s436 = smul.addr %s435, 4
      %s437 = scalar_lea.vmem %s2, %s436
      %s438 = smul.u32 2, %s23
      %s439 = smul.u32 2, %s23
      %p440 = scmp.lt.s32.totalorder %s439, 3
      %s441 = scalar_select %p440, %s439, 3
      %s442 = smul.addr %s441, 4
      %s443 = scalar_lea.vmem %s3, %s442
      %s444 = smul.u32 2, %s23
      %s445 = smul.u32 2, %s24
      %p446 = scmp.lt.s32.totalorder %s445, 3
      %s447 = scalar_select %p446, %s445, 3
      %s448 = smul.addr %s447, 8
      %s449 = scalar_lea.vmem %s4, %s448
      %s450 = smul.u32 2, %s24
      %s451 = smul.u32 2, %s24
      %p452 = scmp.lt.s32.totalorder %s451, 3
      %s453 = scalar_select %p452, %s451, 3
      %s454 = smul.addr %s453, 8
      %s455 = scalar_lea.vmem %s5, %s454
      %s456 = smul.u32 2, %s24
      %s457 = smul.u32 2, %s24
      %p458 = scmp.lt.s32.totalorder %s457, 3
      %s459 = scalar_select %p458, %s457, 3
      %s460 = smul.addr %s459, 4
      %s461 = scalar_lea.vmem %s6, %s460
      %s462 = smul.u32 2, %s24
      %s463 = smul.u32 2, %s24
      %p464 = scmp.lt.s32.totalorder %s463, 3
      %s465 = scalar_select %p464, %s463, 3
      %s466 = smul.addr %s465, 4
      %s467 = scalar_lea.vmem %s7, %s466
      %s468 = smul.u32 2, %s24
      %s469 = smul.u32 2, %s23
      %p470 = scmp.lt.s32.totalorder %s469, 3
      %s471 = scalar_select %p470, %s469, 3
      %s472 = smul.addr %s471, 8
      %s473 = scalar_lea.vmem %s8, %s472
      %s474 = smul.u32 2, %s23
      %p476 = scmp.eq.s32.totalorder %s24, 0
      // Predicated region
      $region53: #{cached_gist_embed_loss.1} parent=51 // pred_check
        %p477 = pneg %p476
      $region54: #{cached_gist_embed_loss.1} parent=51 // pred_check_branch
        %479 = sbr.rel (%p477) target = $region56
      $region55: #{cached_gist_embed_loss.1} parent=51 // pred_region
        %v480 = vld [vmem:[%s425] sm:$0xff]
        %v481 = vld [vmem:[%s425 + $0x8] sm:$0xff]
        %v482 = vld [vmem:[%s431] sm:$0xff]
        %v483 = vld [vmem:[%s431 + $0x8] sm:$0xff]
        %v484 = vmul.f32 %v480, 100.0
        %v485 = vmul.f32 %v481, 100.0
        %486 = vst [vmem:[#allocation2] sm:$0xff] %v484
        %487 = vst [vmem:[#allocation2 + $0x8] sm:$0xff] %v485
        %v488 = vmul.f32 %v482, 100.0
        %v489 = vmul.f32 %v483, 100.0
        %490 = vst [vmem:[#allocation3] sm:$0xff] %v488
        %491 = vst [vmem:[#allocation3 + $0x8] sm:$0xff] %v489
        %vm492 = vcmask 7168
        %493 = vst.msk [vmem:[#allocation4] sm:$0xff] %vm492, -1e+30
        %494 = vst.msk [vmem:[#allocation4 + $0x8] sm:$0xff] %vm492, -1e+30
        %495 = vst.msk [vmem:[#allocation5] sm:$0xff] %vm492, 0.0
        %496 = vst.msk [vmem:[#allocation5 + $0x8] sm:$0xff] %vm492, 0.0
        %v497 = vld [vmem:[%s437] sm:$0xf]
        %v498 = vld [vmem:[%s437 + $0x4] sm:$0xf]
        %v499 = vunpack.c.l.bf16 %v497
        %v500 = vunpack.c.l.bf16 %v498
        %v501 = vld [vmem:[%s443] sm:$0xf]
        %v502 = vld [vmem:[%s443 + $0x4] sm:$0xf]
        %v503 = vunpack.c.l.bf16 %v501
        %v504 = vunpack.c.l.bf16 %v502
        %v505 = vmul.f32 %v499, %v503
        %v506 = vmul.f32 %v500, %v504
        %507 = vadd.xlane.f32.xlu0 %v505
        %v508 = vpop.xlane.xlu0 %507
        %509 = vadd.xlane.f32.xlu0 %v506
        %v510 = vpop.xlane.xlu0 %509
        %511 = vst.msk [vmem:[#allocation6] sm:$0xff] %vm492, %v508
        %512 = vst.msk [vmem:[#allocation6 + $0x8] sm:$0xff] %vm492, %v510
        %v513 = vld [vmem:[#allocation2] sm:$0xff]
        %v514 = vld [vmem:[#allocation2 + $0x8] sm:$0xff]
        %v515 = vmul.f32 %v513, %v482
        %v516 = vmul.f32 %v514, %v483
        %517 = vadd.xlane.f32.xlu0 %v515
        %v518 = vpop.xlane.xlu0 %517
        %519 = vadd.xlane.f32.xlu0 %v516
        %v520 = vpop.xlane.xlu0 %519
        %521 = vst.msk [vmem:[#allocation7] sm:$0xff] %vm492, %v518
        %522 = vst.msk [vmem:[#allocation7 + $0x8] sm:$0xff] %vm492, %v520
        %s523 = smul.u32 %s23, 16
        %v524 = vlaneseq
        %v525 = vshrl.u32 %v524, 7
        %v526 = vadd.s32 %v525, 8
        %v527 = vstv %s523
        %v528 = vadd.s32 %v527, %v525
        %v529 = vadd.s32 %v527, %v526
        %530 = vst.msk [vmem:[#allocation8] sm:$0xff] %vm492, %v528
        %531 = vst.msk [vmem:[#allocation8 + $0x8] sm:$0xff] %vm492, %v529
      $region56: #{cached_gist_embed_loss.1} parent=51 // pred_fallthru
        _
      %v532 = vld [vmem:[#allocation6] sm:$0xff]
      %v533 = vld [vmem:[#allocation6 + $0x8] sm:$0xff]
      %v534 = vld [vmem:[#allocation2] sm:$0xff]
      %v535 = vld [vmem:[#allocation2 + $0x8] sm:$0xff]
      %v536 = vld [vmem:[#allocation3] sm:$0xff]
      %v537 = vld [vmem:[#allocation3 + $0x8] sm:$0xff]
      %v538 = vld [vmem:[%s437] sm:$0xf]
      %v539 = vld [vmem:[%s437 + $0x4] sm:$0xf]
      %v540 = vld [vmem:[%s443] sm:$0xf]
      %v541 = vld [vmem:[%s443 + $0x4] sm:$0xf]
      %v542 = vlaneseq
      %v543 = vand.u32 %v542, 127
      %v544 = vld [vmem:[#allocation8] sm:$0xff]
      %v545 = vld [vmem:[#allocation8 + $0x8] sm:$0xff]
      %s546 = smul.u32 %s24, 16
      %v547 = vstv %s546
      %v548 = vsub.s32 %v544, %v547
      %v549 = vsub.s32 %v545, %v547
      %550 = vset.pattern.permute.xlu0 0
      %551 = vperm.xlu0 %550, %v548
      %v552 = vpop.permute.xlu0 %551
      %553 = vset.pattern.permute.xlu0 0
      %554 = vperm.xlu0 %553, %v549
      %v555 = vpop.permute.xlu0 %554
      %vm556 = vcmp.eq.s32.totalorder %v543, %v552
      %vm557 = vcmp.eq.s32.totalorder %v543, %v555
      %v558 = vld [vmem:[%s449] sm:$0xff]
      %v559 = vld [vmem:[%s449 + $0x8] sm:$0xff]
      %560 = vmatprep.subr.mxu0 0.0
      %561 = vmatpush1.xpose.msra.mxu0 0.0
      %562 = vmatprep.subr.mxu0 0.0
      %563 = vmatpush1.xpose.msra.mxu0 0.0
      %564 = vmatprep.subr.mxu0 0.0
      %565 = vmatpush1.xpose.msra.mxu0 0.0
      %566 = vmatprep.subr.mxu0 0.0
      %567 = vmatpush1.xpose.msra.mxu0 0.0
      %568 = vmatprep.subr.mxu0 0.0
      %569 = vmatpush1.xpose.msra.mxu0 0.0
      %570 = vmatprep.subr.mxu0 0.0
      %571 = vmatpush1.xpose.msra.mxu0 0.0
      %572 = vmatprep.subr.mxu0 0.0
      %573 = vmatpush1.xpose.msra.mxu0 0.0
      %574 = vmatprep.subr.mxu0 0.0
      %575 = vmatpush1.xpose.msra.mxu0 0.0
      %576 = vmatprep.subr.mxu0 0.0
      %577 = vmatpush1.xpose.msra.mxu0 0.0
      %578 = vmatprep.subr.mxu0 0.0
      %579 = vmatpush1.xpose.msra.mxu0 0.0
      %580 = vmatprep.subr.mxu0 0.0
      %581 = vmatpush1.xpose.msra.mxu0 0.0
      %582 = vmatprep.subr.mxu0 0.0
      %583 = vmatpush1.xpose.msra.mxu0 0.0
      %584 = vmatprep.subr.mxu0 0.0
      %585 = vmatpush1.xpose.msra.mxu0 0.0
      %586 = vmatprep.subr.mxu0 0.0
      %587 = vmatpush1.xpose.msra.mxu0 0.0
      %588 = vmatprep.subr.mxu0 0.0
      %589 = vmatpush1.xpose.msra.mxu0 %v559
      %590 = vmatprep.subr.mxu0 0.0
      %591 = vmatpush1.xpose.msra.mxu0 %v558
      %592 = vmatprep.subr.mxu0 0.0
      %593 = vmatpush2.xpose.msra.mxu0 0.0
      %594 = vmatprep.subr.mxu0 0.0
      %595 = vmatpush2.xpose.msra.mxu0 0.0
      %596 = vmatprep.subr.mxu0 0.0
      %597 = vmatpush2.xpose.msra.mxu0 0.0
      %598 = vmatprep.subr.mxu0 0.0
      %599 = vmatpush2.xpose.msra.mxu0 0.0
      %600 = vmatprep.subr.mxu0 0.0
      %601 = vmatpush2.xpose.msra.mxu0 0.0
      %602 = vmatprep.subr.mxu0 0.0
      %603 = vmatpush2.xpose.msra.mxu0 0.0
      %604 = vmatprep.subr.mxu0 0.0
      %605 = vmatpush2.xpose.msra.mxu0 0.0
      %606 = vmatprep.subr.mxu0 0.0
      %607 = vmatpush2.xpose.msra.mxu0 0.0
      %608 = vmatprep.subr.mxu0 0.0
      %609 = vmatpush2.xpose.msra.mxu0 0.0
      %610 = vmatprep.subr.mxu0 0.0
      %611 = vmatpush2.xpose.msra.mxu0 0.0
      %612 = vmatprep.subr.mxu0 0.0
      %613 = vmatpush2.xpose.msra.mxu0 0.0
      %614 = vmatprep.subr.mxu0 0.0
      %615 = vmatpush2.xpose.msra.mxu0 0.0
      %616 = vmatprep.subr.mxu0 0.0
      %617 = vmatpush2.xpose.msra.mxu0 0.0
      %618 = vmatprep.subr.mxu0 0.0
      %619 = vmatpush2.xpose.msra.mxu0 0.0
      %620 = vmatprep.subr.mxu0 0.0
      %621 = vmatpush2.xpose.msra.mxu0 0.0
      %622 = vmatprep.subr.mxu0 0.0
      %623 = vmatpush2.xpose.msra.mxu0 0.0
      %624 = vmatprep.mubr.f32.mxu0 0.0
      %625 = vmatmul.mubr.f32.gmra.mxu0 %v534
      %v626 = vpop.f32.mrf.mxu0
      %v627 = vadd.f32 0.0, %v626
      %v628 = vpop.f32.mrf.mxu0
      %629 = vmatprep.mubr.f32.mxu0 0.0
      %630 = vmatmul.mubr.f32.gmra.mxu0 %v535
      %v631 = vpop.f32.mrf.mxu0
      %v632 = vadd.f32 0.0, %v631
      %v633 = vpop.f32.mrf.mxu0
      %634 = vdwg.mxu0
      %v635 = vld [vmem:[%s461] sm:$0xf]
      %v636 = vld [vmem:[%s461 + $0x4] sm:$0xf]
      %v639 = vunpack.c.l.b16 %v538
      %v640 = vunpack.c.l.b16 %v539
      %v641 = vpack.c.b16 %v640, %v639
      %v645 = vunpack.c.l.b16 %v635
      %v646 = vunpack.c.l.b16 %v636
      %v647 = vpack.c.b16 %v646, %v645
      %649 = vmatprep.subr.bf16.mxu0 0
      %650 = vmatpush1.bf16.xpose.msra.mxu0 0
      %651 = vmatprep.subr.bf16.mxu0 0
      %652 = vmatpush1.bf16.xpose.msra.mxu0 0
      %653 = vmatprep.subr.bf16.mxu0 0
      %654 = vmatpush1.bf16.xpose.msra.mxu0 0
      %655 = vmatprep.subr.bf16.mxu0 0
      %656 = vmatpush1.bf16.xpose.msra.mxu0 0
      %657 = vmatprep.subr.bf16.mxu0 0
      %658 = vmatpush1.bf16.xpose.msra.mxu0 0
      %659 = vmatprep.subr.bf16.mxu0 0
      %660 = vmatpush1.bf16.xpose.msra.mxu0 0
      %661 = vmatprep.subr.bf16.mxu0 0
      %662 = vmatpush1.bf16.xpose.msra.mxu0 0
      %663 = vmatprep.subr.bf16.mxu0 0
      %664 = vmatpush1.bf16.xpose.msra.mxu0 %v647
      %665 = vmatprep.subr.bf16.mxu0 0
      %666 = vmatpush2.bf16.xpose.msra.mxu0 0
      %667 = vmatprep.subr.bf16.mxu0 0
      %668 = vmatpush2.bf16.xpose.msra.mxu0 0
      %669 = vmatprep.subr.bf16.mxu0 0
      %670 = vmatpush2.bf16.xpose.msra.mxu0 0
      %671 = vmatprep.subr.bf16.mxu0 0
      %672 = vmatpush2.bf16.xpose.msra.mxu0 0
      %673 = vmatprep.subr.bf16.mxu0 0
      %674 = vmatpush2.bf16.xpose.msra.mxu0 0
      %675 = vmatprep.subr.bf16.mxu0 0
      %676 = vmatpush2.bf16.xpose.msra.mxu0 0
      %677 = vmatprep.subr.bf16.mxu0 0
      %678 = vmatpush2.bf16.xpose.msra.mxu0 0
      %679 = vmatprep.subr.bf16.mxu0 0
      %680 = vmatpush2.bf16.xpose.msra.mxu0 0
      %681 = vmatprep.mubr.bf16.mxu0 0
      %682 = vmatmul.mubr.bf16.gmra.mxu0 %v641
      %v683 = vpop.f32.mrf.mxu0
      %v684 = vadd.f32 0.0, %v683
      %v685 = vpop.f32.mrf.mxu0
      %v686 = vpop.f32.mrf.mxu0
      %v687 = vadd.f32 0.0, %v686
      %v688 = vpop.f32.mrf.mxu0
      %689 = vdwg.mxu0
      %691 = vset.pattern.permute.xlu0 0
      %692 = vperm.xlu0 %691, %v532
      %v693 = vpop.permute.xlu0 %692
      %696 = vset.pattern.permute.xlu0 0
      %697 = vperm.xlu0 %696, %v533
      %v698 = vpop.permute.xlu0 %697
      %vm700 = vcmp.gt.f32.partialorder %v684, %v693
      %vm701 = vcmp.gt.f32.partialorder %v687, %v698
      %vm702 = vmxor %vm556, 1
      %vm703 = vmxor %vm557, 1
      %vm704 = vmand %vm700, %vm702
      %vm705 = vmand %vm701, %vm703
      %v706 = vsel %vm704, -inf, %v627
      %v707 = vsel %vm705, -inf, %v632
      %vm708 = vcmask 130048
      %v709 = vsel %vm708, %v706, -inf
      %710 = vmax.xlane.f32.xlu0 %v709
      %v711 = vpop.xlane.xlu0 %710
      %v712 = vsel %vm708, %v707, -inf
      %713 = vmax.xlane.f32.xlu0 %v712
      %v714 = vpop.xlane.xlu0 %713
      %v715 = vld [vmem:[%s455] sm:$0xff]
      %v716 = vld [vmem:[%s455 + $0x8] sm:$0xff]
      %717 = vmatprep.subr.mxu0 0.0
      %718 = vmatpush1.xpose.msra.mxu0 0.0
      %719 = vmatprep.subr.mxu0 0.0
      %720 = vmatpush1.xpose.msra.mxu0 0.0
      %721 = vmatprep.subr.mxu0 0.0
      %722 = vmatpush1.xpose.msra.mxu0 0.0
      %723 = vmatprep.subr.mxu0 0.0
      %724 = vmatpush1.xpose.msra.mxu0 0.0
      %725 = vmatprep.subr.mxu0 0.0
      %726 = vmatpush1.xpose.msra.mxu0 0.0
      %727 = vmatprep.subr.mxu0 0.0
      %728 = vmatpush1.xpose.msra.mxu0 0.0
      %729 = vmatprep.subr.mxu0 0.0
      %730 = vmatpush1.xpose.msra.mxu0 0.0
      %731 = vmatprep.subr.mxu0 0.0
      %732 = vmatpush1.xpose.msra.mxu0 0.0
      %733 = vmatprep.subr.mxu0 0.0
      %734 = vmatpush1.xpose.msra.mxu0 0.0
      %735 = vmatprep.subr.mxu0 0.0
      %736 = vmatpush1.xpose.msra.mxu0 0.0
      %737 = vmatprep.subr.mxu0 0.0
      %738 = vmatpush1.xpose.msra.mxu0 0.0
      %739 = vmatprep.subr.mxu0 0.0
      %740 = vmatpush1.xpose.msra.mxu0 0.0
      %741 = vmatprep.subr.mxu0 0.0
      %742 = vmatpush1.xpose.msra.mxu0 0.0
      %743 = vmatprep.subr.mxu0 0.0
      %744 = vmatpush1.xpose.msra.mxu0 0.0
      %745 = vmatprep.subr.mxu0 0.0
      %746 = vmatpush1.xpose.msra.mxu0 %v716
      %747 = vmatprep.subr.mxu0 0.0
      %748 = vmatpush1.xpose.msra.mxu0 %v715
      %749 = vmatprep.subr.mxu0 0.0
      %750 = vmatpush2.xpose.msra.mxu0 0.0
      %751 = vmatprep.subr.mxu0 0.0
      %752 = vmatpush2.xpose.msra.mxu0 0.0
      %753 = vmatprep.subr.mxu0 0.0
      %754 = vmatpush2.xpose.msra.mxu0 0.0
      %755 = vmatprep.subr.mxu0 0.0
      %756 = vmatpush2.xpose.msra.mxu0 0.0
      %757 = vmatprep.subr.mxu0 0.0
      %758 = vmatpush2.xpose.msra.mxu0 0.0
      %759 = vmatprep.subr.mxu0 0.0
      %760 = vmatpush2.xpose.msra.mxu0 0.0
      %761 = vmatprep.subr.mxu0 0.0
      %762 = vmatpush2.xpose.msra.mxu0 0.0
      %763 = vmatprep.subr.mxu0 0.0
      %764 = vmatpush2.xpose.msra.mxu0 0.0
      %765 = vmatprep.subr.mxu0 0.0
      %766 = vmatpush2.xpose.msra.mxu0 0.0
      %767 = vmatprep.subr.mxu0 0.0
      %768 = vmatpush2.xpose.msra.mxu0 0.0
      %769 = vmatprep.subr.mxu0 0.0
      %770 = vmatpush2.xpose.msra.mxu0 0.0
      %771 = vmatprep.subr.mxu0 0.0
      %772 = vmatpush2.xpose.msra.mxu0 0.0
      %773 = vmatprep.subr.mxu0 0.0
      %774 = vmatpush2.xpose.msra.mxu0 0.0
      %775 = vmatprep.subr.mxu0 0.0
      %776 = vmatpush2.xpose.msra.mxu0 0.0
      %777 = vmatprep.subr.mxu0 0.0
      %778 = vmatpush2.xpose.msra.mxu0 0.0
      %779 = vmatprep.subr.mxu0 0.0
      %780 = vmatpush2.xpose.msra.mxu0 0.0
      %781 = vmatprep.mubr.f32.mxu0 0.0
      %782 = vmatmul.mubr.f32.gmra.mxu0 %v534
      %v783 = vpop.f32.mrf.mxu0
      %v784 = vadd.f32 0.0, %v783
      %v785 = vpop.f32.mrf.mxu0
      %786 = vmatprep.mubr.f32.mxu0 0.0
      %787 = vmatmul.mubr.f32.gmra.mxu0 %v535
      %v788 = vpop.f32.mrf.mxu0
      %v789 = vadd.f32 0.0, %v788
      %v790 = vpop.f32.mrf.mxu0
      %791 = vdwg.mxu0
      %v792 = vld [vmem:[%s467] sm:$0xf]
      %v793 = vld [vmem:[%s467 + $0x4] sm:$0xf]
      %v796 = vunpack.c.l.b16 %v792
      %v797 = vunpack.c.l.b16 %v793
      %v798 = vpack.c.b16 %v797, %v796
      %800 = vmatprep.subr.bf16.mxu0 0
      %801 = vmatpush1.bf16.xpose.msra.mxu0 0
      %802 = vmatprep.subr.bf16.mxu0 0
      %803 = vmatpush1.bf16.xpose.msra.mxu0 0
      %804 = vmatprep.subr.bf16.mxu0 0
      %805 = vmatpush1.bf16.xpose.msra.mxu0 0
      %806 = vmatprep.subr.bf16.mxu0 0
      %807 = vmatpush1.bf16.xpose.msra.mxu0 0
      %808 = vmatprep.subr.bf16.mxu0 0
      %809 = vmatpush1.bf16.xpose.msra.mxu0 0
      %810 = vmatprep.subr.bf16.mxu0 0
      %811 = vmatpush1.bf16.xpose.msra.mxu0 0
      %812 = vmatprep.subr.bf16.mxu0 0
      %813 = vmatpush1.bf16.xpose.msra.mxu0 0
      %814 = vmatprep.subr.bf16.mxu0 0
      %815 = vmatpush1.bf16.xpose.msra.mxu0 %v798
      %816 = vmatprep.subr.bf16.mxu0 0
      %817 = vmatpush2.bf16.xpose.msra.mxu0 0
      %818 = vmatprep.subr.bf16.mxu0 0
      %819 = vmatpush2.bf16.xpose.msra.mxu0 0
      %820 = vmatprep.subr.bf16.mxu0 0
      %821 = vmatpush2.bf16.xpose.msra.mxu0 0
      %822 = vmatprep.subr.bf16.mxu0 0
      %823 = vmatpush2.bf16.xpose.msra.mxu0 0
      %824 = vmatprep.subr.bf16.mxu0 0
      %825 = vmatpush2.bf16.xpose.msra.mxu0 0
      %826 = vmatprep.subr.bf16.mxu0 0
      %827 = vmatpush2.bf16.xpose.msra.mxu0 0
      %828 = vmatprep.subr.bf16.mxu0 0
      %829 = vmatpush2.bf16.xpose.msra.mxu0 0
      %830 = vmatprep.subr.bf16.mxu0 0
      %831 = vmatpush2.bf16.xpose.msra.mxu0 0
      %832 = vmatprep.mubr.bf16.mxu0 0
      %833 = vmatmul.mubr.bf16.gmra.mxu0 %v641
      %v834 = vpop.f32.mrf.mxu0
      %v835 = vadd.f32 0.0, %v834
      %v836 = vpop.f32.mrf.mxu0
      %v837 = vpop.f32.mrf.mxu0
      %v838 = vadd.f32 0.0, %v837
      %v839 = vpop.f32.mrf.mxu0
      %840 = vdwg.mxu0
      %vm841 = vcmp.gt.f32.partialorder %v835, %v693
      %vm842 = vcmp.gt.f32.partialorder %v838, %v698
      %v843 = vsel %vm841, -inf, %v784
      %v844 = vsel %vm842, -inf, %v789
      %v845 = vsel %vm708, %v843, -inf
      %846 = vmax.xlane.f32.xlu0 %v845
      %v847 = vpop.xlane.xlu0 %846
      %v848 = vsel %vm708, %v844, -inf
      %849 = vmax.xlane.f32.xlu0 %v848
      %v850 = vpop.xlane.xlu0 %849
      %v851 = vmax.f32 %v711, %v847
      %v852 = vmax.f32 %v714, %v850
      %853 = vmatprep.subr.mxu0 0.0
      %854 = vmatpush1.xpose.msra.mxu0 0.0
      %855 = vmatprep.subr.mxu0 0.0
      %856 = vmatpush1.xpose.msra.mxu0 0.0
      %857 = vmatprep.subr.mxu0 0.0
      %858 = vmatpush1.xpose.msra.mxu0 0.0
      %859 = vmatprep.subr.mxu0 0.0
      %860 = vmatpush1.xpose.msra.mxu0 0.0
      %861 = vmatprep.subr.mxu0 0.0
      %862 = vmatpush1.xpose.msra.mxu0 0.0
      %863 = vmatprep.subr.mxu0 0.0
      %864 = vmatpush1.xpose.msra.mxu0 0.0
      %865 = vmatprep.subr.mxu0 0.0
      %866 = vmatpush1.xpose.msra.mxu0 0.0
      %867 = vmatprep.subr.mxu0 0.0
      %868 = vmatpush1.xpose.msra.mxu0 0.0
      %869 = vmatprep.subr.mxu0 0.0
      %870 = vmatpush1.xpose.msra.mxu0 0.0
      %871 = vmatprep.subr.mxu0 0.0
      %872 = vmatpush1.xpose.msra.mxu0 0.0
      %873 = vmatprep.subr.mxu0 0.0
      %874 = vmatpush1.xpose.msra.mxu0 0.0
      %875 = vmatprep.subr.mxu0 0.0
      %876 = vmatpush1.xpose.msra.mxu0 0.0
      %877 = vmatprep.subr.mxu0 0.0
      %878 = vmatpush1.xpose.msra.mxu0 0.0
      %879 = vmatprep.subr.mxu0 0.0
      %880 = vmatpush1.xpose.msra.mxu0 0.0
      %881 = vmatprep.subr.mxu0 0.0
      %882 = vmatpush1.xpose.msra.mxu0 %v559
      %883 = vmatprep.subr.mxu0 0.0
      %884 = vmatpush1.xpose.msra.mxu0 %v558
      %885 = vmatprep.subr.mxu0 0.0
      %886 = vmatpush2.xpose.msra.mxu0 0.0
      %887 = vmatprep.subr.mxu0 0.0
      %888 = vmatpush2.xpose.msra.mxu0 0.0
      %889 = vmatprep.subr.mxu0 0.0
      %890 = vmatpush2.xpose.msra.mxu0 0.0
      %891 = vmatprep.subr.mxu0 0.0
      %892 = vmatpush2.xpose.msra.mxu0 0.0
      %893 = vmatprep.subr.mxu0 0.0
      %894 = vmatpush2.xpose.msra.mxu0 0.0
      %895 = vmatprep.subr.mxu0 0.0
      %896 = vmatpush2.xpose.msra.mxu0 0.0
      %897 = vmatprep.subr.mxu0 0.0
      %898 = vmatpush2.xpose.msra.mxu0 0.0
      %899 = vmatprep.subr.mxu0 0.0
      %900 = vmatpush2.xpose.msra.mxu0 0.0
      %901 = vmatprep.subr.mxu0 0.0
      %902 = vmatpush2.xpose.msra.mxu0 0.0
      %903 = vmatprep.subr.mxu0 0.0
      %904 = vmatpush2.xpose.msra.mxu0 0.0
      %905 = vmatprep.subr.mxu0 0.0
      %906 = vmatpush2.xpose.msra.mxu0 0.0
      %907 = vmatprep.subr.mxu0 0.0
      %908 = vmatpush2.xpose.msra.mxu0 0.0
      %909 = vmatprep.subr.mxu0 0.0
      %910 = vmatpush2.xpose.msra.mxu0 0.0
      %911 = vmatprep.subr.mxu0 0.0
      %912 = vmatpush2.xpose.msra.mxu0 0.0
      %913 = vmatprep.subr.mxu0 0.0
      %914 = vmatpush2.xpose.msra.mxu0 0.0
      %915 = vmatprep.subr.mxu0 0.0
      %916 = vmatpush2.xpose.msra.mxu0 0.0
      %917 = vmatprep.mubr.f32.mxu0 0.0
      %918 = vmatmul.mubr.f32.gmra.mxu0 %v536
      %v919 = vpop.f32.mrf.mxu0
      %v920 = vadd.f32 0.0, %v919
      %v921 = vpop.f32.mrf.mxu0
      %922 = vmatprep.mubr.f32.mxu0 0.0
      %923 = vmatmul.mubr.f32.gmra.mxu0 %v537
      %v924 = vpop.f32.mrf.mxu0
      %v925 = vadd.f32 0.0, %v924
      %v926 = vpop.f32.mrf.mxu0
      %927 = vdwg.mxu0
      %v930 = vunpack.c.l.b16 %v540
      %v931 = vunpack.c.l.b16 %v541
      %v932 = vpack.c.b16 %v931, %v930
      %934 = vmatprep.subr.bf16.mxu0 0
      %935 = vmatpush1.bf16.xpose.msra.mxu0 0
      %936 = vmatprep.subr.bf16.mxu0 0
      %937 = vmatpush1.bf16.xpose.msra.mxu0 0
      %938 = vmatprep.subr.bf16.mxu0 0
      %939 = vmatpush1.bf16.xpose.msra.mxu0 0
      %940 = vmatprep.subr.bf16.mxu0 0
      %941 = vmatpush1.bf16.xpose.msra.mxu0 0
      %942 = vmatprep.subr.bf16.mxu0 0
      %943 = vmatpush1.bf16.xpose.msra.mxu0 0
      %944 = vmatprep.subr.bf16.mxu0 0
      %945 = vmatpush1.bf16.xpose.msra.mxu0 0
      %946 = vmatprep.subr.bf16.mxu0 0
      %947 = vmatpush1.bf16.xpose.msra.mxu0 0
      %948 = vmatprep.subr.bf16.mxu0 0
      %949 = vmatpush1.bf16.xpose.msra.mxu0 %v647
      %950 = vmatprep.subr.bf16.mxu0 0
      %951 = vmatpush2.bf16.xpose.msra.mxu0 0
      %952 = vmatprep.subr.bf16.mxu0 0
      %953 = vmatpush2.bf16.xpose.msra.mxu0 0
      %954 = vmatprep.subr.bf16.mxu0 0
      %955 = vmatpush2.bf16.xpose.msra.mxu0 0
      %956 = vmatprep.subr.bf16.mxu0 0
      %957 = vmatpush2.bf16.xpose.msra.mxu0 0
      %958 = vmatprep.subr.bf16.mxu0 0
      %959 = vmatpush2.bf16.xpose.msra.mxu0 0
      %960 = vmatprep.subr.bf16.mxu0 0
      %961 = vmatpush2.bf16.xpose.msra.mxu0 0
      %962 = vmatprep.subr.bf16.mxu0 0
      %963 = vmatpush2.bf16.xpose.msra.mxu0 0
      %964 = vmatprep.subr.bf16.mxu0 0
      %965 = vmatpush2.bf16.xpose.msra.mxu0 0
      %966 = vmatprep.mubr.bf16.mxu0 0
      %967 = vmatmul.mubr.bf16.gmra.mxu0 %v932
      %v968 = vpop.f32.mrf.mxu0
      %v969 = vadd.f32 0.0, %v968
      %v970 = vpop.f32.mrf.mxu0
      %v971 = vpop.f32.mrf.mxu0
      %v972 = vadd.f32 0.0, %v971
      %v973 = vpop.f32.mrf.mxu0
      %974 = vdwg.mxu0
      %vm975 = vcmp.gt.f32.partialorder %v969, %v693
      %vm976 = vcmp.gt.f32.partialorder %v972, %v698
      %v977 = vsel %vm975, -inf, %v920
      %v978 = vsel %vm976, -inf, %v925
      %v979 = vsel %vm708, %v977, -inf
      %980 = vmax.xlane.f32.xlu0 %v979
      %v981 = vpop.xlane.xlu0 %980
      %v982 = vsel %vm708, %v978, -inf
      %983 = vmax.xlane.f32.xlu0 %v982
      %v984 = vpop.xlane.xlu0 %983
      %v985 = vmax.f32 %v851, %v981
      %v986 = vmax.f32 %v852, %v984
      %v987 = vld [vmem:[#allocation4] sm:$0xff]
      %v988 = vld [vmem:[#allocation4 + $0x8] sm:$0xff]
      %v989 = vmax.f32 %v987, %v985
      %v990 = vmax.f32 %v988, %v986
      %v991 = vsub.f32 %v987, %v989
      %v992 = vsub.f32 %v988, %v990
      %v993 = vmul.f32 %v991, 1.442695
      %v994 = vpow.pop %v993
      %v995 = vmul.f32 %v992, 1.442695
      %v996 = vpow.pop %v995
      %v997 = vld [vmem:[#allocation5] sm:$0xff]
      %v998 = vld [vmem:[#allocation5 + $0x8] sm:$0xff]
      %v999 = vmul.f32 %v994, %v997
      %v1000 = vmul.f32 %v996, %v998
      %1002 = vset.pattern.permute.xlu0 0
      %1003 = vperm.xlu0 %1002, %v989
      %v1004 = vpop.permute.xlu0 %1003
      %1007 = vset.pattern.permute.xlu0 0
      %1008 = vperm.xlu0 %1007, %v990
      %v1009 = vpop.permute.xlu0 %1008
      %v1011 = vsub.f32 %v706, %v1004
      %v1012 = vsub.f32 %v707, %v1009
      %v1013 = vmul.f32 %v1011, 1.442695
      %v1014 = vpow.pop %v1013
      %v1015 = vmul.f32 %v1012, 1.442695
      %v1016 = vpow.pop %v1015
      %v1017 = vsel %vm708, %v1014, 0.0
      %1018 = vadd.xlane.f32.xlu0 %v1017
      %v1019 = vpop.xlane.xlu0 %1018
      %v1020 = vsel %vm708, %v1016, 0.0
      %1021 = vadd.xlane.f32.xlu0 %v1020
      %v1022 = vpop.xlane.xlu0 %1021
      %v1023 = vadd.f32 %v999, %v1019
      %v1024 = vadd.f32 %v1000, %v1022
      %v1025 = vsub.f32 %v843, %v1004
      %v1026 = vsub.f32 %v844, %v1009
      %v1027 = vmul.f32 %v1025, 1.442695
      %v1028 = vpow.pop %v1027
      %v1029 = vmul.f32 %v1026, 1.442695
      %v1030 = vpow.pop %v1029
      %v1031 = vsel %vm708, %v1028, 0.0
      %1032 = vadd.xlane.f32.xlu0 %v1031
      %v1033 = vpop.xlane.xlu0 %1032
      %v1034 = vsel %vm708, %v1030, 0.0
      %1035 = vadd.xlane.f32.xlu0 %v1034
      %v1036 = vpop.xlane.xlu0 %1035
      %v1037 = vadd.f32 %v1023, %v1033
      %v1038 = vadd.f32 %v1024, %v1036
      %v1039 = vsub.f32 %v977, %v1004
      %v1040 = vsub.f32 %v978, %v1009
      %v1041 = vmul.f32 %v1039, 1.442695
      %v1042 = vpow.pop %v1041
      %v1043 = vmul.f32 %v1040, 1.442695
      %v1044 = vpow.pop %v1043
      %v1045 = vsel %vm708, %v1042, 0.0
      %1046 = vadd.xlane.f32.xlu0 %v1045
      %v1047 = vpop.xlane.xlu0 %1046
      %v1048 = vsel %vm708, %v1044, 0.0
      %1049 = vadd.xlane.f32.xlu0 %v1048
      %v1050 = vpop.xlane.xlu0 %1049
      %v1051 = vadd.f32 %v1037, %v1047
      %v1052 = vadd.f32 %v1038, %v1050
      %vm1053 = vcmask 7168
      %1054 = vst.msk [vmem:[#allocation5] sm:$0xff] %vm1053, %v1051
      %1055 = vst.msk [vmem:[#allocation5 + $0x8] sm:$0xff] %vm1053, %v1052
      %1056 = vst.msk [vmem:[#allocation4] sm:$0xff] %vm1053, %v989
      %1057 = vst.msk [vmem:[#allocation4 + $0x8] sm:$0xff] %vm1053, %v990
      %p1058 = scmp.eq.s32.totalorder %s24, 1
      // Predicated region
      $region57: #{cached_gist_embed_loss.1} parent=51 // pred_check
        %p1059 = pneg %p1058
      $region58: #{cached_gist_embed_loss.1} parent=51 // pred_check_branch
        %1061 = sbr.rel (%p1059) target = $region60
      $region59: #{cached_gist_embed_loss.1} parent=51 // pred_region
        %v1062 = vld [vmem:[#allocation4] sm:$0xff]
        %v1063 = vld [vmem:[#allocation4 + $0x8] sm:$0xff]
        %v1064 = vld [vmem:[#allocation5] sm:$0xff]
        %v1065 = vld [vmem:[#allocation5 + $0x8] sm:$0xff]
        %v1066 = vlog2.pop %v1064
        %v1067 = vmul.f32 %v1066, 0.6931472
        %v1068 = vlog2.pop %v1065
        %v1069 = vmul.f32 %v1068, 0.6931472
        %v1070 = vadd.f32 %v1062, %v1067
        %v1071 = vadd.f32 %v1063, %v1069
        %v1072 = vld [vmem:[#allocation7] sm:$0xff]
        %v1073 = vld [vmem:[#allocation7 + $0x8] sm:$0xff]
        %v1074 = vsub.f32 %v1070, %v1072
        %v1075 = vsub.f32 %v1071, %v1073
        %1076 = vst.msk [vmem:[%s473] sm:$0xff] %vm1053, %v1074
        %1077 = vst.msk [vmem:[%s473 + $0x8] sm:$0xff] %vm1053, %v1075
      $region60: #{cached_gist_embed_loss.1} parent=51 // pred_fallthru
        _
      %s1078 = smul.u32 2, %s23
      %p1079 = scmp.lt.s32.totalorder %s1078, 3
      %s1080 = scalar_select %p1079, %s1078, 3
      %s1081 = smul.addr %s1080, 8
      %s1082 = scalar_lea.vmem %s8, %s1081
      // Predicated region
      $region61: #{cached_gist_embed_loss.1} parent=51 // pred_check
        %p1083 = pneg %p257
      $region62: #{cached_gist_embed_loss.1} parent=51 // pred_check_branch
        %1085 = sbr.rel (%p1083) target = $region64
      $region63: #{cached_gist_embed_loss.1} parent=51 // pred_region
        %s1086 = smul.u32 2, %s23
      $region64: #{cached_gist_embed_loss.1} parent=51 // pred_fallthru
        _
    $region52: #{cached_gist_embed_loss.1} parent=5 // pred_fallthru
      _
    %p1087 = scmp.le.s32.totalorder 2, %s14
    // Predicated region
    $region65: #{cached_gist_embed_loss.1} parent=5 // pred_check
      %p1088 = pneg %p1087
    $region66: #{cached_gist_embed_loss.1} parent=5 // pred_check_branch
      %1090 = sbr.rel (%p1088) target = $region68
    $region67: #{cached_gist_embed_loss.1} parent=5 // pred_region
      %s1091 = ssub.s32 %s14, 2
      // Predicated region
      $region69: #{cached_gist_embed_loss.1} parent=67 // pred_check
        %p1092 = pneg %p263
      $region70: #{cached_gist_embed_loss.1} parent=67 // pred_check_branch
        %1094 = sbr.rel (%p1092) target = $region72
      $region71: #{cached_gist_embed_loss.1} parent=67 // pred_region
        %s1095 = smul.u32 2, %s25
        %p1096 = scmp.lt.s32.totalorder %s1095, 3
        %s1097 = scalar_select %p1096, %s1095, 3
        %s1098 = smul.addr %s1097, 8
        %s1099 = scalar_lea.vmem %s8, %s1098
      $region72: #{cached_gist_embed_loss.1} parent=67 // pred_fallthru
        _
    $region68: #{cached_gist_embed_loss.1} parent=5 // pred_fallthru
      _
  $region6: #{cached_gist_embed_loss.1} parent=0 // loop_footer
    %s18 = sadd.s32 1, %s14
  $region7: #{cached_gist_embed_loss.1} parent=0 // loop_footer_branch
    %13 = sbr.rel target = $region3
  $region8: #{cached_gist_embed_loss.1} parent=0 // loop_exit
    _

</llo_original>
